<compile_context>
chip_gen: v7x
topology: tpu7x:2x2x1
jax: 0.10.0
libtpu: 0.0.40
codegen_flags: <defaults>
</compile_context>

<pallas_src>
import functools

import jax
import jax.numpy as jnp
from jax import lax
from jax.experimental import pallas as pl
from jax.experimental.pallas import tpu as pltpu

_EPS = 1e-15
_EPS2 = _EPS * _EPS       # clamp for squared norms
_C = 1.0                  # curvature
_SC = 1.0                 # sqrt(curvature)
_LANE = 128
_SUBLANE = 8


def _round_up(x, m):
    return (x + m - 1) // m * m


def _pad2(a, rows, cols):
    return jnp.pad(a, ((0, rows - a.shape[0]), (0, cols - a.shape[1])))


# --------------------------------------------------------------------------------------
# In-kernel hyperbolic math (fused / optimized formulations).  Only exp/log/sqrt/select
# style ops -> safe Mosaic lowerings; all per-element transcendentals stay in f32.
# --------------------------------------------------------------------------------------
def _fused_expmap_fc(u, z_hat, s_r, two_zn):
    """poincare_fully_connected(expmap0(u)) with the expmap folded in algebraically.

    Identities used (p = expmap0(u), n = ||u||):
        lam(p) - 1            = cosh(2*sc*n)
        sc*lam(p)*<p, z/||z||> = sinh(2*sc*n)/n * <u, z/||z||>
    Weight-only factors hoisted to the wrapper:
        z_hat  = z * cosh(2*sc*r) / ||z||_col
        s_r    = sinh(2*sc*r)
        two_zn = 2 * ||z||_col / sc
    Returns the *pre-projection* vector w = sinh(sc*dist)/sc.
    """
    n2 = jnp.maximum(jnp.sum(u * u, axis=-1, keepdims=True), _EPS2)
    inv_n = lax.rsqrt(n2)                               # 1/||u||          (B, 1)
    t2 = jnp.minimum(2.0 * _SC * n2 * inv_n, 60.0)      # 2*sc*||u||, clamp keeps exp finite
    e2 = jnp.exp(t2)                                    # (B, 1): cheap per-row EUP op
    ie2 = 1.0 / e2
    cosh2 = 0.5 * (e2 + ie2)                            # lam - 1
    sinh2 = 0.5 * (e2 - ie2)
    uz = jnp.dot(u.astype(z_hat.dtype), z_hat, preferred_element_type=jnp.float32)  # MXU
    inner = (sinh2 * inv_n) * uz - cosh2 * s_r
    # signed asinh: stable for large |inner| of either sign
    sgn = jnp.where(inner >= 0.0, 1.0, -1.0)
    ai = jnp.abs(inner)
    dist = two_zn * (sgn * jnp.log(ai + jnp.sqrt(ai * ai + 1.0)))
    t = jnp.minimum(jnp.maximum(_SC * dist, -30.0), 30.0)   # overflow clamp for exp
    e = jnp.exp(t)                                          # (B, out): the binding EUP cost
    return (0.5 / _SC) * (e - 1.0 / e)                       # w = sinh(sc*dist)/sc


def _hrelu_tangent(w):
    """relu(logmap0(project(w))) where project(w) = w / (1 + sqrt(1 + c*||w||^2)).

    Identity: logmap0(project(w)) = asinh(sc*||w||) / (2*sc*||w||) * w, so the projection,
    its reduction and the atanh all collapse into one positive per-row scale.
    """
    n2 = jnp.maximum(jnp.sum(w * w, axis=-1, keepdims=True), _EPS2)
    inv_n = lax.rsqrt(n2)
    a = _SC * n2 * inv_n                                 # sc*||w||  (>= 0)
    scale = jnp.log(a + jnp.sqrt(a * a + 1.0)) * ((0.5 / _SC) * inv_n)
    return jnp.maximum(scale * w, 0.0)


def _project(w):
    ww = jnp.sum(w * w, axis=-1, keepdims=True)
    # exact (B,1) reciprocal: negligible cost, scales the kernel output directly
    return w / (1.0 + jnp.sqrt(1.0 + _C * ww))


# --------------------------------------------------------------------------------------
# Pallas kernel: one batch tile, weights VMEM-resident
# --------------------------------------------------------------------------------------
def _hyp_deepset_kernel(x_ref, w1_ref, b1_ref, w2_ref, b2_ref,
                        zh1_ref, sr1_ref, tz1_ref,
                        zh2_ref, sr2_ref, tz2_ref, o_ref):
    mdt = w1_ref.dtype                                   # matmul operand dtype (f32 or bf16)
    h = jnp.dot(x_ref[...].astype(mdt), w1_ref[...],
                preferred_element_type=jnp.float32) + b1_ref[...]
    h = jnp.maximum(h, 0.0)
    u = jnp.dot(h.astype(mdt), w2_ref[...],
                preferred_element_type=jnp.float32) + b2_ref[...]
    w = _fused_expmap_fc(u, zh1_ref[...], sr1_ref[...], tz1_ref[...])     # manifold_map + HLinear1
    u2 = _hrelu_tangent(w)                                                # HReLU (log side + relu)
    w2v = _fused_expmap_fc(u2, zh2_ref[...], sr2_ref[...], tz2_ref[...])  # HReLU exp side + HLinear2
    o_ref[...] = _project(w2v).astype(o_ref.dtype)


# --------------------------------------------------------------------------------------
# Wrapper: tile/VMEM derivation, weight-only precompute, grid / BlockSpecs
# --------------------------------------------------------------------------------------
def _default_matmul_dtype():
    try:
        kind = jax.devices()[0].device_kind.lower()
    except Exception:
        return jnp.float32
    if "v6" in kind or "v7" in kind:
        return jnp.bfloat16   # bf16-native MXU: ~3x matmul throughput, half weight VMEM
    return jnp.float32        # v5e and older: keep f32 operands


def _vmem_cap_bytes():
    try:
        return (int(pltpu.get_tpu_info().vmem_capacity_bytes) * 3) // 4   # leave 25% headroom
    except Exception:
        return 48 << 20       # safe under v7x's 64 MiB physical VMEM per TensorCore


def _hoist_fc(z_pad, r_pad):
    """Precompute the weight-only transcendentals of poincare_fully_connected."""
    zn = jnp.maximum(jnp.sqrt(jnp.sum(z_pad * z_pad, axis=0, keepdims=True)), _EPS)
    tcr = 2.0 * _SC * r_pad
    z_hat = z_pad * (jnp.cosh(tcr) / zn)
    s_r = jnp.sinh(tcr)
    two_zn = 2.0 * zn / _SC
    return z_hat, s_r, two_zn


@functools.partial(jax.jit,
                   static_argnames=("tile_b", "matmul_dtype", "single_buffer_weights"))
def _forward(x, params, *, tile_b, matmul_dtype, single_buffer_weights):
    w1, b1, w2, b2, z1, r1, z2, r2 = params
    B, in_f = x.shape
    euc = w1.shape[1]
    hyp = w2.shape[1]
    out_f = z2.shape[1]

    # lane-dense feature padding for hidden / output dims only; x's in_f stays unpadded
    # (block last dim == full array dim is legal) so no 8x HBM amplification of the x stream.
    euc_p = _round_up(euc, _LANE)
    hyp_p = _round_up(hyp, _LANE)
    out_p = _round_up(out_f, _LANE)
    # TODO(synk): on v5e an unpadded (tile_b, out_f) output block may cut writeback bytes 16x.

    mm_bytes = jnp.dtype(matmul_dtype).itemsize
    n_wbuf = 1 if single_buffer_weights else 2
    cap = _vmem_cap_bytes()

    # batch tile: ~256 rows per step, at least ~4 grid steps when B allows it
    # (software pipelining of the x/out streams + v7x megacore balance, small pad waste)
    if tile_b is None:
        tile_b = min(256, _round_up(pl.cdiv(B, 4), _SUBLANE))
    tile_b = max(_SUBLANE, _round_up(int(tile_b), _SUBLANE))

    def vmem_estimate(tb):
        weight = n_wbuf * mm_bytes * (in_f * euc_p + euc_p * hyp_p
                                      + hyp_p * hyp_p + hyp_p * out_p)
        vecs = n_wbuf * 4 * (euc_p + 3 * hyp_p + 2 * out_p)
        stream = 2 * 4 * tb * (in_f + out_p)                  # double-buffered x / out tiles
        temps = 12 * 4 * tb * max(in_f, euc_p, hyp_p, out_p)  # live f32 activation temporaries
        return weight + vecs + stream + temps + (4 << 20)

    while tile_b > _SUBLANE and 2 * vmem_estimate(tile_b) > cap:
        tile_b = max(_SUBLANE, _round_up(tile_b // 2, _SUBLANE))
    vmem_limit = int(min(max(2 * vmem_estimate(tile_b), 32 << 20), cap))

    b_pad = _round_up(B, tile_b)
    grid = (b_pad // tile_b,)

    # only the ragged tail of the batch is zero-padded (rows are independent; zero rows are
    # numerically safe under the in-kernel clamps and sliced away afterwards)
    xp = x.astype(jnp.float32)
    if b_pad != B:
        xp = jnp.pad(xp, ((0, b_pad - B), (0, 0)))

    # zero-padding of hidden/output feature dims is exact: padded rows/cols contribute nothing
    w1p = _pad2(w1, in_f, euc_p).astype(matmul_dtype)
    b1p = _pad2(b1, 1, euc_p)
    w2p = _pad2(w2, euc_p, hyp_p).astype(matmul_dtype)
    b2p = _pad2(b2, 1, hyp_p)
    zh1, sr1, tz1 = _hoist_fc(_pad2(z1, hyp_p, hyp_p), _pad2(r1, 1, hyp_p))
    zh2, sr2, tz2 = _hoist_fc(_pad2(z2, hyp_p, out_p), _pad2(r2, 1, out_p))
    zh1 = zh1.astype(matmul_dtype)
    zh2 = zh2.astype(matmul_dtype)

    wt_elems = in_f * euc_p + euc_p * hyp_p + hyp_p * hyp_p + hyp_p * out_p
    cost = pl.CostEstimate(
        flops=2 * b_pad * wt_elems,
        transcendentals=b_pad * (3 * (hyp_p + out_p) + 8),
        bytes_accessed=(4 * b_pad * (in_f + out_p) + mm_bytes * wt_elems
                        + 4 * (euc_p + 3 * hyp_p + 2 * out_p)))

    def _resident(shape):
        # constant index_map => fetched once and kept VMEM-resident; single-buffering halves
        # the resident-weight footprint (matters most under v7x's 64 MiB VMEM).
        if single_buffer_weights:
            return pl.BlockSpec(shape, lambda i: (0, 0), pipeline_mode=pl.Buffered(1))
        return pl.BlockSpec(shape, lambda i: (0, 0))

    # TODO(synk): if hyp_p grows to >= ~1024, add a reduction grid axis (or emit_pipeline) over
    # the Z1/Z2 contraction instead of keeping them fully resident.
    y = pl.pallas_call(
        _hyp_deepset_kernel,
        out_shape=jax.ShapeDtypeStruct((b_pad, out_p), jnp.float32),
        grid=grid,
        in_specs=[
            pl.BlockSpec((tile_b, in_f), lambda i: (i, 0)),   # x: streamed batch tiles
            _resident((in_f, euc_p)),                         # W1
            _resident((1, euc_p)),                            # b1
            _resident((euc_p, hyp_p)),                        # W2
            _resident((1, hyp_p)),                            # b2
            _resident((hyp_p, hyp_p)),                        # Z1_hat
            _resident((1, hyp_p)),                            # sinh(2 sc r1)
            _resident((1, hyp_p)),                            # 2 ||z1|| / sc
            _resident((hyp_p, out_p)),                        # Z2_hat
            _resident((1, out_p)),                            # sinh(2 sc r2)
            _resident((1, out_p)),                            # 2 ||z2|| / sc
        ],
        out_specs=pl.BlockSpec((tile_b, out_p), lambda i: (i, 0)),
        compiler_params=pltpu.CompilerParams(
            dimension_semantics=("parallel",),
            vmem_limit_bytes=vmem_limit),
        cost_estimate=cost,
    )(xp, w1p, b1p, w2p, b2p, zh1, sr1, tz1, zh2, sr2, tz2)

    return y[:B, :out_f]


def hyperbolic_deepset_forward(x, params, *, tile_b=None, matmul_dtype=None):
    if matmul_dtype is None:
        matmul_dtype = _default_matmul_dtype()
    try:
        return _forward(x, params, tile_b=tile_b, matmul_dtype=matmul_dtype,
                        single_buffer_weights=True)
    except Exception:
        # pl.Buffered(1) (single-buffered resident weights) unsupported on this jax version:
        # fall back to the default double-buffered weight specs.
        return _forward(x, params, tile_b=tile_b, matmul_dtype=matmul_dtype,
                        single_buffer_weights=False)


# --------------------------------------------------------------------------------------
# Pure-JAX reference (honest, unfused hypll math) for validation
# --------------------------------------------------------------------------------------
def _asinh(x):
    return jnp.log(x + jnp.sqrt(x * x + 1.0))


def _atanh(x):
    return 0.5 * jnp.log((1.0 + x) / (1.0 - x))


def _sinh_ref(x):
    return 0.5 * (jnp.exp(x) - jnp.exp(-x))


def _cosh_ref(x):
    return 0.5 * (jnp.exp(x) + jnp.exp(-x))


def _expmap0_ref(v):
    vn = jnp.maximum(jnp.sqrt(jnp.sum(v * v, axis=-1, keepdims=True)), _EPS)
    return jnp.tanh(_SC * vn) * v / (_SC * vn)


def _logmap0_ref(y):
    yn = jnp.maximum(jnp.sqrt(jnp.sum(y * y, axis=-1, keepdims=True)), _EPS)
    return _atanh(_SC * yn) * y / (_SC * yn)


def _poincare_fc_ref(p, z, r):
    lam = 2.0 / (1.0 - _C * jnp.sum(p * p, axis=-1, keepdims=True))
    zn = jnp.maximum(jnp.sqrt(jnp.sum(z * z, axis=0, keepdims=True)), _EPS)
    pz = jnp.dot(p, z, preferred_element_type=jnp.float32)
    tcr = 2.0 * _SC * r
    dist = (2.0 * zn / _SC) * _asinh(
        _SC * lam * (pz / zn) * _cosh_ref(tcr) - (lam - 1.0) * _sinh_ref(tcr))
    w = _sinh_ref(_SC * dist) / _SC
    return w / (1.0 + jnp.sqrt(1.0 + _C * jnp.sum(w * w, axis=-1, keepdims=True)))


def hyperbolic_deepset_ref(x, params):
    w1, b1, w2, b2, z1, r1, z2, r2 = params
    h = jnp.maximum(x @ w1 + b1, 0.0)
    h = h @ w2 + b2
    p = _expmap0_ref(h)
    p = _poincare_fc_ref(p, z1, r1)
    p = _expmap0_ref(jnp.maximum(_logmap0_ref(p), 0.0))
    p = _poincare_fc_ref(p, z2, r2)
    return p


# --------------------------------------------------------------------------------------
# Parameter init (mirrors nn.Linear / hypll HLinear initializers)
# --------------------------------------------------------------------------------------
def init_params(key, in_features, out_features, euc_width, hyp_width):
    ks = jax.random.split(key, 8)

    def uni(k, shape, fan_in):
        bound = 1.0 / jnp.sqrt(fan_in)
        return jax.random.uniform(k, shape, jnp.float32, -bound, bound)

    w1 = uni(ks[0], (in_features, euc_width), in_features)     # nn.Linear pre-transposed
    b1 = uni(ks[1], (1, euc_width), in_features)
    w2 = uni(ks[2], (euc_width, hyp_width), euc_width)
    b2 = uni(ks[3], (1, hyp_width), euc_width)
    z1 = jax.random.normal(ks[4], (hyp_width, hyp_width), jnp.float32) * (2.0 * hyp_width * hyp_width) ** -0.5
    r1 = 0.01 * jax.random.normal(ks[5], (1, hyp_width), jnp.float32)
    z2 = jax.random.normal(ks[6], (hyp_width, out_features), jnp.float32) * (2.0 * hyp_width * out_features) ** -0.5
    r2 = 0.01 * jax.random.normal(ks[7], (1, out_features), jnp.float32)
    return (w1, b1, w2, b2, z1, r1, z2, r2)


if __name__ == "__main__":
    in_features, euc_width, hyp_width, out_features = 16, 32, 32, 8
    key = jax.random.PRNGKey(0)
    kx, kp, kx2 = jax.random.split(key, 3)
    params = init_params(kp, in_features, out_features, euc_width, hyp_width)

    # small single-tile run (grid=(1,)), f32 matmul operands, strict tolerance
    B = 4
    x = 0.1 * jax.random.normal(kx, (B, in_features), jnp.float32)
    out = jax.block_until_ready(
        hyperbolic_deepset_forward(x, params, matmul_dtype=jnp.float32))
    ref = hyperbolic_deepset_ref(x, params)
    assert out.shape == (B, out_features)
    assert bool(jnp.all(jnp.isfinite(out)))
    assert jnp.allclose(out, ref, rtol=5e-3, atol=3e-5), "small-batch mismatch vs JAX reference"

    # multi-tile pipelined run (5 grid steps, ragged last tile handled by batch zero-padding)
    B2 = 300
    x2 = 0.5 * jax.random.normal(kx2, (B2, in_features), jnp.float32)
    out2 = jax.block_until_ready(
        hyperbolic_deepset_forward(x2, params, tile_b=64, matmul_dtype=jnp.float32))
    ref2 = hyperbolic_deepset_ref(x2, params)
    assert out2.shape == (B2, out_features)
    assert bool(jnp.all(jnp.isfinite(out2)))
    assert jnp.allclose(out2, ref2, rtol=5e-3, atol=3e-5), "tiled-batch mismatch vs JAX reference"

    # bf16 MXU-operand path (v6e / v7x optimization); elementwise chain stays f32, looser check
    out3 = jax.block_until_ready(
        hyperbolic_deepset_forward(x2, params, tile_b=64, matmul_dtype=jnp.bfloat16))
    assert out3.shape == (B2, out_features)
    assert bool(jnp.all(jnp.isfinite(out3)))
    assert jnp.allclose(out3, ref2, rtol=5e-2, atol=3e-3), "bf16-matmul path mismatch vs reference"

    print("KERNEL_OK")
</pallas_src>

<mosaic_0001>
module attributes {stable_mosaic.version = 11 : i64} {
  func.func @_hyp_deepset_kernel(%arg0: i32, %arg1: memref<8x16xf32, #tpu.memory_space<vmem>>, %arg2: memref<16x128xf32, #tpu.memory_space<vmem>>, %arg3: memref<1x128xf32, #tpu.memory_space<vmem>>, %arg4: memref<128x128xf32, #tpu.memory_space<vmem>>, %arg5: memref<1x128xf32, #tpu.memory_space<vmem>>, %arg6: memref<128x128xf32, #tpu.memory_space<vmem>>, %arg7: memref<1x128xf32, #tpu.memory_space<vmem>>, %arg8: memref<1x128xf32, #tpu.memory_space<vmem>>, %arg9: memref<128x128xf32, #tpu.memory_space<vmem>>, %arg10: memref<1x128xf32, #tpu.memory_space<vmem>>, %arg11: memref<1x128xf32, #tpu.memory_space<vmem>>, %arg12: memref<8x128xf32, #tpu.memory_space<vmem>>) attributes {dimension_semantics = [#tpu.dimension_semantics<parallel>], iteration_bounds = array<i64: 1>, scalar_prefetch = 0 : i64, scratch_operands = 0 : i64, tpu.core_type = #tpu.core_type<tc>, window_params = [{transform_indices = @transform_0, window_bounds = array<i64: 8, 16>}, {pipeline_mode = #tpu.pipeline_mode<synchronous>, transform_indices = @transform_1, window_bounds = array<i64: 16, 128>}, {pipeline_mode = #tpu.pipeline_mode<synchronous>, transform_indices = @transform_2, window_bounds = array<i64: 1, 128>}, {pipeline_mode = #tpu.pipeline_mode<synchronous>, transform_indices = @transform_3, window_bounds = array<i64: 128, 128>}, {pipeline_mode = #tpu.pipeline_mode<synchronous>, transform_indices = @transform_4, window_bounds = array<i64: 1, 128>}, {pipeline_mode = #tpu.pipeline_mode<synchronous>, transform_indices = @transform_5, window_bounds = array<i64: 128, 128>}, {pipeline_mode = #tpu.pipeline_mode<synchronous>, transform_indices = @transform_6, window_bounds = array<i64: 1, 128>}, {pipeline_mode = #tpu.pipeline_mode<synchronous>, transform_indices = @transform_7, window_bounds = array<i64: 1, 128>}, {pipeline_mode = #tpu.pipeline_mode<synchronous>, transform_indices = @transform_8, window_bounds = array<i64: 128, 128>}, {pipeline_mode = #tpu.pipeline_mode<synchronous>, transform_indices = @transform_9, window_bounds = array<i64: 1, 128>}, {pipeline_mode = #tpu.pipeline_mode<synchronous>, transform_indices = @transform_10, window_bounds = array<i64: 1, 128>}, {transform_indices = @transform_11, window_bounds = array<i64: 8, 128>}]} {
    %c0 = arith.constant 0 : index
    %c0_0 = arith.constant 0 : index
    %0 = vector.load %arg1[%c0, %c0_0] : memref<8x16xf32, #tpu.memory_space<vmem>>, vector<8x16xf32>
    %c0_1 = arith.constant 0 : index
    %c0_2 = arith.constant 0 : index
    %1 = vector.load %arg2[%c0_1, %c0_2] : memref<16x128xf32, #tpu.memory_space<vmem>>, vector<16x128xf32>
    %cst = arith.constant dense<0.000000e+00> : vector<8x128xf32>
    %2 = tpu.matmul %0, %1, %cst {dimension_numbers = #tpu.dot_dimension_numbers<[1], [0], [0], [1], [0, 0, 1, 1], [], []>} : vector<8x16xf32>, vector<16x128xf32>, vector<8x128xf32> -> vector<8x128xf32>
    %c0_3 = arith.constant 0 : index
    %c0_4 = arith.constant 0 : index
    %3 = vector.load %arg3[%c0_3, %c0_4] : memref<1x128xf32, #tpu.memory_space<vmem>>, vector<1x128xf32>
    %4 = vector.broadcast %3 : vector<1x128xf32> to vector<8x128xf32>
    %5 = arith.addf %2, %4 : vector<8x128xf32>
    %cst_5 = arith.constant 0.000000e+00 : f32
    %6 = vector.broadcast %cst_5 : f32 to vector<8x128xf32>
    %7 = arith.maximumf %5, %6 : vector<8x128xf32>
    %c0_6 = arith.constant 0 : index
    %c0_7 = arith.constant 0 : index
    %8 = vector.load %arg4[%c0_6, %c0_7] : memref<128x128xf32, #tpu.memory_space<vmem>>, vector<128x128xf32>
    %cst_8 = arith.constant dense<0.000000e+00> : vector<8x128xf32>
    %9 = tpu.matmul %7, %8, %cst_8 {dimension_numbers = #tpu.dot_dimension_numbers<[1], [0], [0], [1], [0, 0, 1, 1], [], []>} : vector<8x128xf32>, vector<128x128xf32>, vector<8x128xf32> -> vector<8x128xf32>
    %c0_9 = arith.constant 0 : index
    %c0_10 = arith.constant 0 : index
    %10 = vector.load %arg5[%c0_9, %c0_10] : memref<1x128xf32, #tpu.memory_space<vmem>>, vector<1x128xf32>
    %11 = vector.broadcast %10 : vector<1x128xf32> to vector<8x128xf32>
    %12 = arith.addf %9, %11 : vector<8x128xf32>
    %c0_11 = arith.constant 0 : index
    %c0_12 = arith.constant 0 : index
    %13 = vector.load %arg6[%c0_11, %c0_12] : memref<128x128xf32, #tpu.memory_space<vmem>>, vector<128x128xf32>
    %c0_13 = arith.constant 0 : index
    %c0_14 = arith.constant 0 : index
    %14 = vector.load %arg7[%c0_13, %c0_14] : memref<1x128xf32, #tpu.memory_space<vmem>>, vector<1x128xf32>
    %c0_15 = arith.constant 0 : index
    %c0_16 = arith.constant 0 : index
    %15 = vector.load %arg8[%c0_15, %c0_16] : memref<1x128xf32, #tpu.memory_space<vmem>>, vector<1x128xf32>
    %16 = arith.mulf %12, %12 : vector<8x128xf32>
    %cst_17 = arith.constant dense<0.000000e+00> : vector<8xf32>
    %17 = vector.multi_reduction <add>, %16, %cst_17 [1] : vector<8x128xf32> to vector<8xf32>
    %18 = vector.shape_cast %17 : vector<8xf32> to vector<8x1xf32>
    %cst_18 = arith.constant 1.000000e-30 : f32
    %19 = vector.broadcast %cst_18 : f32 to vector<8x1xf32>
    %20 = arith.maximumf %18, %19 : vector<8x1xf32>
    %21 = math.rsqrt %20 : vector<8x1xf32>
    %cst_19 = arith.constant 2.000000e+00 : f32
    %22 = vector.broadcast %cst_19 : f32 to vector<8x1xf32>
    %23 = arith.mulf %22, %20 : vector<8x1xf32>
    %24 = arith.mulf %23, %21 : vector<8x1xf32>
    %cst_20 = arith.constant 6.000000e+01 : f32
    %25 = vector.broadcast %cst_20 : f32 to vector<8x1xf32>
    %26 = arith.minimumf %24, %25 : vector<8x1xf32>
    %27 = math.exp %26 : vector<8x1xf32>
    %cst_21 = arith.constant 1.000000e+00 : f32
    %28 = vector.broadcast %cst_21 : f32 to vector<8x1xf32>
    %29 = arith.divf %28, %27 : vector<8x1xf32>
    %30 = arith.addf %27, %29 : vector<8x1xf32>
    %cst_22 = arith.constant 5.000000e-01 : f32
    %31 = vector.broadcast %cst_22 : f32 to vector<8x1xf32>
    %32 = arith.mulf %31, %30 : vector<8x1xf32>
    %33 = arith.subf %27, %29 : vector<8x1xf32>
    %cst_23 = arith.constant 5.000000e-01 : f32
    %34 = vector.broadcast %cst_23 : f32 to vector<8x1xf32>
    %35 = arith.mulf %34, %33 : vector<8x1xf32>
    %cst_24 = arith.constant dense<0.000000e+00> : vector<8x128xf32>
    %36 = tpu.matmul %12, %13, %cst_24 {dimension_numbers = #tpu.dot_dimension_numbers<[1], [0], [0], [1], [0, 0, 1, 1], [], []>} : vector<8x128xf32>, vector<128x128xf32>, vector<8x128xf32> -> vector<8x128xf32>
    %37 = arith.mulf %35, %21 : vector<8x1xf32>
    %38 = vector.broadcast %37 : vector<8x1xf32> to vector<8x128xf32>
    %39 = arith.mulf %38, %36 : vector<8x128xf32>
    %40 = vector.broadcast %32 : vector<8x1xf32> to vector<8x128xf32>
    %41 = vector.broadcast %14 : vector<1x128xf32> to vector<8x128xf32>
    %42 = arith.mulf %40, %41 : vector<8x128xf32>
    %43 = arith.subf %39, %42 : vector<8x128xf32>
    %cst_25 = arith.constant 0.000000e+00 : f32
    %44 = vector.broadcast %cst_25 : f32 to vector<8x128xf32>
    %45 = arith.cmpf oge, %43, %44 : vector<8x128xf32>
    %cst_26 = arith.constant 1.000000e+00 : f32
    %cst_27 = arith.constant -1.000000e+00 : f32
    %46 = vector.broadcast %cst_26 : f32 to vector<8x128xf32>
    %47 = vector.broadcast %cst_27 : f32 to vector<8x128xf32>
    %48 = arith.select %45, %46, %47 : vector<8x128xi1>, vector<8x128xf32>
    %49 = math.absf %43 : vector<8x128xf32>
    %50 = arith.mulf %49, %49 : vector<8x128xf32>
    %cst_28 = arith.constant 1.000000e+00 : f32
    %51 = vector.broadcast %cst_28 : f32 to vector<8x128xf32>
    %52 = arith.addf %50, %51 : vector<8x128xf32>
    %53 = math.sqrt %52 : vector<8x128xf32>
    %54 = arith.addf %49, %53 : vector<8x128xf32>
    %55 = math.log %54 : vector<8x128xf32>
    %56 = arith.mulf %48, %55 : vector<8x128xf32>
    %57 = vector.broadcast %15 : vector<1x128xf32> to vector<8x128xf32>
    %58 = arith.mulf %57, %56 : vector<8x128xf32>
    %cst_29 = arith.constant 1.000000e+00 : f32
    %59 = vector.broadcast %cst_29 : f32 to vector<8x128xf32>
    %60 = arith.mulf %59, %58 : vector<8x128xf32>
    %cst_30 = arith.constant -3.000000e+01 : f32
    %61 = vector.broadcast %cst_30 : f32 to vector<8x128xf32>
    %62 = arith.maximumf %60, %61 : vector<8x128xf32>
    %cst_31 = arith.constant 3.000000e+01 : f32
    %63 = vector.broadcast %cst_31 : f32 to vector<8x128xf32>
    %64 = arith.minimumf %62, %63 : vector<8x128xf32>
    %65 = math.exp %64 : vector<8x128xf32>
    %cst_32 = arith.constant 1.000000e+00 : f32
    %66 = vector.broadcast %cst_32 : f32 to vector<8x128xf32>
    %67 = arith.divf %66, %65 : vector<8x128xf32>
    %68 = arith.subf %65, %67 : vector<8x128xf32>
    %cst_33 = arith.constant 5.000000e-01 : f32
    %69 = vector.broadcast %cst_33 : f32 to vector<8x128xf32>
    %70 = arith.mulf %69, %68 : vector<8x128xf32>
    %71 = arith.mulf %70, %70 : vector<8x128xf32>
    %cst_34 = arith.constant dense<0.000000e+00> : vector<8xf32>
    %72 = vector.multi_reduction <add>, %71, %cst_34 [1] : vector<8x128xf32> to vector<8xf32>
    %73 = vector.shape_cast %72 : vector<8xf32> to vector<8x1xf32>
    %cst_35 = arith.constant 1.000000e-30 : f32
    %74 = vector.broadcast %cst_35 : f32 to vector<8x1xf32>
    %75 = arith.maximumf %73, %74 : vector<8x1xf32>
    %76 = math.rsqrt %75 : vector<8x1xf32>
    %cst_36 = arith.constant 1.000000e+00 : f32
    %77 = vector.broadcast %cst_36 : f32 to vector<8x1xf32>
    %78 = arith.mulf %77, %75 : vector<8x1xf32>
    %79 = arith.mulf %78, %76 : vector<8x1xf32>
    %80 = arith.mulf %79, %79 : vector<8x1xf32>
    %cst_37 = arith.constant 1.000000e+00 : f32
    %81 = vector.broadcast %cst_37 : f32 to vector<8x1xf32>
    %82 = arith.addf %80, %81 : vector<8x1xf32>
    %83 = math.sqrt %82 : vector<8x1xf32>
    %84 = arith.addf %79, %83 : vector<8x1xf32>
    %85 = math.log %84 : vector<8x1xf32>
    %cst_38 = arith.constant 5.000000e-01 : f32
    %86 = vector.broadcast %cst_38 : f32 to vector<8x1xf32>
    %87 = arith.mulf %86, %76 : vector<8x1xf32>
    %88 = arith.mulf %85, %87 : vector<8x1xf32>
    %89 = vector.broadcast %88 : vector<8x1xf32> to vector<8x128xf32>
    %90 = arith.mulf %89, %70 : vector<8x128xf32>
    %cst_39 = arith.constant 0.000000e+00 : f32
    %91 = vector.broadcast %cst_39 : f32 to vector<8x128xf32>
    %92 = arith.maximumf %90, %91 : vector<8x128xf32>
    %c0_40 = arith.constant 0 : index
    %c0_41 = arith.constant 0 : index
    %93 = vector.load %arg9[%c0_40, %c0_41] : memref<128x128xf32, #tpu.memory_space<vmem>>, vector<128x128xf32>
    %c0_42 = arith.constant 0 : index
    %c0_43 = arith.constant 0 : index
    %94 = vector.load %arg10[%c0_42, %c0_43] : memref<1x128xf32, #tpu.memory_space<vmem>>, vector<1x128xf32>
    %c0_44 = arith.constant 0 : index
    %c0_45 = arith.constant 0 : index
    %95 = vector.load %arg11[%c0_44, %c0_45] : memref<1x128xf32, #tpu.memory_space<vmem>>, vector<1x128xf32>
    %96 = arith.mulf %92, %92 : vector<8x128xf32>
    %cst_46 = arith.constant dense<0.000000e+00> : vector<8xf32>
    %97 = vector.multi_reduction <add>, %96, %cst_46 [1] : vector<8x128xf32> to vector<8xf32>
    %98 = vector.shape_cast %97 : vector<8xf32> to vector<8x1xf32>
    %cst_47 = arith.constant 1.000000e-30 : f32
    %99 = vector.broadcast %cst_47 : f32 to vector<8x1xf32>
    %100 = arith.maximumf %98, %99 : vector<8x1xf32>
    %101 = math.rsqrt %100 : vector<8x1xf32>
    %cst_48 = arith.constant 2.000000e+00 : f32
    %102 = vector.broadcast %cst_48 : f32 to vector<8x1xf32>
    %103 = arith.mulf %102, %100 : vector<8x1xf32>
    %104 = arith.mulf %103, %101 : vector<8x1xf32>
    %cst_49 = arith.constant 6.000000e+01 : f32
    %105 = vector.broadcast %cst_49 : f32 to vector<8x1xf32>
    %106 = arith.minimumf %104, %105 : vector<8x1xf32>
    %107 = math.exp %106 : vector<8x1xf32>
    %cst_50 = arith.constant 1.000000e+00 : f32
    %108 = vector.broadcast %cst_50 : f32 to vector<8x1xf32>
    %109 = arith.divf %108, %107 : vector<8x1xf32>
    %110 = arith.addf %107, %109 : vector<8x1xf32>
    %cst_51 = arith.constant 5.000000e-01 : f32
    %111 = vector.broadcast %cst_51 : f32 to vector<8x1xf32>
    %112 = arith.mulf %111, %110 : vector<8x1xf32>
    %113 = arith.subf %107, %109 : vector<8x1xf32>
    %cst_52 = arith.constant 5.000000e-01 : f32
    %114 = vector.broadcast %cst_52 : f32 to vector<8x1xf32>
    %115 = arith.mulf %114, %113 : vector<8x1xf32>
    %cst_53 = arith.constant dense<0.000000e+00> : vector<8x128xf32>
    %116 = tpu.matmul %92, %93, %cst_53 {dimension_numbers = #tpu.dot_dimension_numbers<[1], [0], [0], [1], [0, 0, 1, 1], [], []>} : vector<8x128xf32>, vector<128x128xf32>, vector<8x128xf32> -> vector<8x128xf32>
    %117 = arith.mulf %115, %101 : vector<8x1xf32>
    %118 = vector.broadcast %117 : vector<8x1xf32> to vector<8x128xf32>
    %119 = arith.mulf %118, %116 : vector<8x128xf32>
    %120 = vector.broadcast %112 : vector<8x1xf32> to vector<8x128xf32>
    %121 = vector.broadcast %94 : vector<1x128xf32> to vector<8x128xf32>
    %122 = arith.mulf %120, %121 : vector<8x128xf32>
    %123 = arith.subf %119, %122 : vector<8x128xf32>
    %cst_54 = arith.constant 0.000000e+00 : f32
    %124 = vector.broadcast %cst_54 : f32 to vector<8x128xf32>
    %125 = arith.cmpf oge, %123, %124 : vector<8x128xf32>
    %cst_55 = arith.constant 1.000000e+00 : f32
    %cst_56 = arith.constant -1.000000e+00 : f32
    %126 = vector.broadcast %cst_55 : f32 to vector<8x128xf32>
    %127 = vector.broadcast %cst_56 : f32 to vector<8x128xf32>
    %128 = arith.select %125, %126, %127 : vector<8x128xi1>, vector<8x128xf32>
    %129 = math.absf %123 : vector<8x128xf32>
    %130 = arith.mulf %129, %129 : vector<8x128xf32>
    %cst_57 = arith.constant 1.000000e+00 : f32
    %131 = vector.broadcast %cst_57 : f32 to vector<8x128xf32>
    %132 = arith.addf %130, %131 : vector<8x128xf32>
    %133 = math.sqrt %132 : vector<8x128xf32>
    %134 = arith.addf %129, %133 : vector<8x128xf32>
    %135 = math.log %134 : vector<8x128xf32>
    %136 = arith.mulf %128, %135 : vector<8x128xf32>
    %137 = vector.broadcast %95 : vector<1x128xf32> to vector<8x128xf32>
    %138 = arith.mulf %137, %136 : vector<8x128xf32>
    %cst_58 = arith.constant 1.000000e+00 : f32
    %139 = vector.broadcast %cst_58 : f32 to vector<8x128xf32>
    %140 = arith.mulf %139, %138 : vector<8x128xf32>
    %cst_59 = arith.constant -3.000000e+01 : f32
    %141 = vector.broadcast %cst_59 : f32 to vector<8x128xf32>
    %142 = arith.maximumf %140, %141 : vector<8x128xf32>
    %cst_60 = arith.constant 3.000000e+01 : f32
    %143 = vector.broadcast %cst_60 : f32 to vector<8x128xf32>
    %144 = arith.minimumf %142, %143 : vector<8x128xf32>
    %145 = math.exp %144 : vector<8x128xf32>
    %cst_61 = arith.constant 1.000000e+00 : f32
    %146 = vector.broadcast %cst_61 : f32 to vector<8x128xf32>
    %147 = arith.divf %146, %145 : vector<8x128xf32>
    %148 = arith.subf %145, %147 : vector<8x128xf32>
    %cst_62 = arith.constant 5.000000e-01 : f32
    %149 = vector.broadcast %cst_62 : f32 to vector<8x128xf32>
    %150 = arith.mulf %149, %148 : vector<8x128xf32>
    %151 = arith.mulf %150, %150 : vector<8x128xf32>
    %cst_63 = arith.constant dense<0.000000e+00> : vector<8xf32>
    %152 = vector.multi_reduction <add>, %151, %cst_63 [1] : vector<8x128xf32> to vector<8xf32>
    %153 = vector.shape_cast %152 : vector<8xf32> to vector<8x1xf32>
    %cst_64 = arith.constant 1.000000e+00 : f32
    %154 = vector.broadcast %cst_64 : f32 to vector<8x1xf32>
    %155 = arith.mulf %154, %153 : vector<8x1xf32>
    %cst_65 = arith.constant 1.000000e+00 : f32
    %156 = vector.broadcast %cst_65 : f32 to vector<8x1xf32>
    %157 = arith.addf %156, %155 : vector<8x1xf32>
    %158 = math.sqrt %157 : vector<8x1xf32>
    %cst_66 = arith.constant 1.000000e+00 : f32
    %159 = vector.broadcast %cst_66 : f32 to vector<8x1xf32>
    %160 = arith.addf %159, %158 : vector<8x1xf32>
    %161 = vector.broadcast %160 : vector<8x1xf32> to vector<8x128xf32>
    %162 = arith.divf %150, %161 : vector<8x128xf32>
    %c0_67 = arith.constant 0 : index
    %c0_68 = arith.constant 0 : index
    %163 = vector.load %arg12[%c0_67, %c0_68] : memref<8x128xf32, #tpu.memory_space<vmem>>, vector<8x128xf32>
    tpu.vector_store %arg12[%c0_67, %c0_68], %162 {strides = array<i32>} : memref<8x128xf32, #tpu.memory_space<vmem>>, vector<8x128xf32>,
    return
  }
  func.func @transform_0(%arg0: i32) -> (i32, i32) {
    %c0_i32 = arith.constant 0 : i32
    %c0_i32_0 = arith.constant 0 : i32
    return %arg0, %c0_i32 : i32, i32
  }
  func.func @transform_1(%arg0: i32) -> (i32, i32) {
    %c0_i32 = arith.constant 0 : i32
    %c0_i32_0 = arith.constant 0 : i32
    %c0_i32_1 = arith.constant 0 : i32
    return %c0_i32, %c0_i32_0 : i32, i32
  }
  func.func @transform_2(%arg0: i32) -> (i32, i32) {
    %c0_i32 = arith.constant 0 : i32
    %c0_i32_0 = arith.constant 0 : i32
    %c0_i32_1 = arith.constant 0 : i32
    return %c0_i32, %c0_i32_0 : i32, i32
  }
  func.func @transform_3(%arg0: i32) -> (i32, i32) {
    %c0_i32 = arith.constant 0 : i32
    %c0_i32_0 = arith.constant 0 : i32
    %c0_i32_1 = arith.constant 0 : i32
    return %c0_i32, %c0_i32_0 : i32, i32
  }
  func.func @transform_4(%arg0: i32) -> (i32, i32) {
    %c0_i32 = arith.constant 0 : i32
    %c0_i32_0 = arith.constant 0 : i32
    %c0_i32_1 = arith.constant 0 : i32
    return %c0_i32, %c0_i32_0 : i32, i32
  }
  func.func @transform_5(%arg0: i32) -> (i32, i32) {
    %c0_i32 = arith.constant 0 : i32
    %c0_i32_0 = arith.constant 0 : i32
    %c0_i32_1 = arith.constant 0 : i32
    return %c0_i32, %c0_i32_0 : i32, i32
  }
  func.func @transform_6(%arg0: i32) -> (i32, i32) {
    %c0_i32 = arith.constant 0 : i32
    %c0_i32_0 = arith.constant 0 : i32
    %c0_i32_1 = arith.constant 0 : i32
    return %c0_i32, %c0_i32_0 : i32, i32
  }
  func.func @transform_7(%arg0: i32) -> (i32, i32) {
    %c0_i32 = arith.constant 0 : i32
    %c0_i32_0 = arith.constant 0 : i32
    %c0_i32_1 = arith.constant 0 : i32
    return %c0_i32, %c0_i32_0 : i32, i32
  }
  func.func @transform_8(%arg0: i32) -> (i32, i32) {
    %c0_i32 = arith.constant 0 : i32
    %c0_i32_0 = arith.constant 0 : i32
    %c0_i32_1 = arith.constant 0 : i32
    return %c0_i32, %c0_i32_0 : i32, i32
  }
  func.func @transform_9(%arg0: i32) -> (i32, i32) {
    %c0_i32 = arith.constant 0 : i32
    %c0_i32_0 = arith.constant 0 : i32
    %c0_i32_1 = arith.constant 0 : i32
    return %c0_i32, %c0_i32_0 : i32, i32
  }
  func.func @transform_10(%arg0: i32) -> (i32, i32) {
    %c0_i32 = arith.constant 0 : i32
    %c0_i32_0 = arith.constant 0 : i32
    %c0_i32_1 = arith.constant 0 : i32
    return %c0_i32, %c0_i32_0 : i32, i32
  }
  func.func @transform_11(%arg0: i32) -> (i32, i32) {
    %c0_i32 = arith.constant 0 : i32
    %c0_i32_0 = arith.constant 0 : i32
    return %arg0, %c0_i32 : i32, i32
  }
}

module attributes {stable_mosaic.version = 11 : i64} {
  func.func @_hyp_deepset_kernel(%arg0: i32, %arg1: memref<8x16xf32, #tpu.memory_space<vmem>>, %arg2: memref<16x128xf32, #tpu.memory_space<vmem>>, %arg3: memref<1x128xf32, #tpu.memory_space<vmem>>, %arg4: memref<128x128xf32, #tpu.memory_space<vmem>>, %arg5: memref<1x128xf32, #tpu.memory_space<vmem>>, %arg6: memref<128x128xf32, #tpu.memory_space<vmem>>, %arg7: memref<1x128xf32, #tpu.memory_space<vmem>>, %arg8: memref<1x128xf32, #tpu.memory_space<vmem>>, %arg9: memref<128x128xf32, #tpu.memory_space<vmem>>, %arg10: memref<1x128xf32, #tpu.memory_space<vmem>>, %arg11: memref<1x128xf32, #tpu.memory_space<vmem>>, %arg12: memref<8x128xf32, #tpu.memory_space<vmem>>) attributes {dimension_semantics = [#tpu.dimension_semantics<parallel>], iteration_bounds = array<i64: 1>, scalar_prefetch = 0 : i64, scratch_operands = 0 : i64, tpu.core_type = #tpu.core_type<tc>, window_params = [{transform_indices = @transform_0, window_bounds = array<i64: 8, 16>}, {pipeline_mode = #tpu.pipeline_mode<synchronous>, transform_indices = @transform_1, window_bounds = array<i64: 16, 128>}, {pipeline_mode = #tpu.pipeline_mode<synchronous>, transform_indices = @transform_2, window_bounds = array<i64: 1, 128>}, {pipeline_mode = #tpu.pipeline_mode<synchronous>, transform_indices = @transform_3, window_bounds = array<i64: 128, 128>}, {pipeline_mode = #tpu.pipeline_mode<synchronous>, transform_indices = @transform_4, window_bounds = array<i64: 1, 128>}, {pipeline_mode = #tpu.pipeline_mode<synchronous>, transform_indices = @transform_5, window_bounds = array<i64: 128, 128>}, {pipeline_mode = #tpu.pipeline_mode<synchronous>, transform_indices = @transform_6, window_bounds = array<i64: 1, 128>}, {pipeline_mode = #tpu.pipeline_mode<synchronous>, transform_indices = @transform_7, window_bounds = array<i64: 1, 128>}, {pipeline_mode = #tpu.pipeline_mode<synchronous>, transform_indices = @transform_8, window_bounds = array<i64: 128, 128>}, {pipeline_mode = #tpu.pipeline_mode<synchronous>, transform_indices = @transform_9, window_bounds = array<i64: 1, 128>}, {pipeline_mode = #tpu.pipeline_mode<synchronous>, transform_indices = @transform_10, window_bounds = array<i64: 1, 128>}, {transform_indices = @transform_11, window_bounds = array<i64: 8, 128>}]} {
    %c0 = arith.constant 0 : index
    %c0_0 = arith.constant 0 : index
    %0 = vector.load %arg1[%c0, %c0_0] : memref<8x16xf32, #tpu.memory_space<vmem>>, vector<8x16xf32>
    %c0_1 = arith.constant 0 : index
    %c0_2 = arith.constant 0 : index
    %1 = vector.load %arg2[%c0_1, %c0_2] : memref<16x128xf32, #tpu.memory_space<vmem>>, vector<16x128xf32>
    %cst = arith.constant dense<0.000000e+00> : vector<8x128xf32>
    %2 = tpu.matmul %0, %1, %cst {dimension_numbers = #tpu.dot_dimension_numbers<[1], [0], [0], [1], [0, 0, 1, 1], [], []>} : vector<8x16xf32>, vector<16x128xf32>, vector<8x128xf32> -> vector<8x128xf32>
    %c0_3 = arith.constant 0 : index
    %c0_4 = arith.constant 0 : index
    %3 = vector.load %arg3[%c0_3, %c0_4] : memref<1x128xf32, #tpu.memory_space<vmem>>, vector<1x128xf32>
    %4 = vector.broadcast %3 : vector<1x128xf32> to vector<8x128xf32>
    %5 = arith.addf %2, %4 : vector<8x128xf32>
    %cst_5 = arith.constant 0.000000e+00 : f32
    %6 = vector.broadcast %cst_5 : f32 to vector<8x128xf32>
    %7 = arith.maximumf %5, %6 : vector<8x128xf32>
    %c0_6 = arith.constant 0 : index
    %c0_7 = arith.constant 0 : index
    %8 = vector.load %arg4[%c0_6, %c0_7] : memref<128x128xf32, #tpu.memory_space<vmem>>, vector<128x128xf32>
    %cst_8 = arith.constant dense<0.000000e+00> : vector<8x128xf32>
    %9 = tpu.matmul %7, %8, %cst_8 {dimension_numbers = #tpu.dot_dimension_numbers<[1], [0], [0], [1], [0, 0, 1, 1], [], []>} : vector<8x128xf32>, vector<128x128xf32>, vector<8x128xf32> -> vector<8x128xf32>
    %c0_9 = arith.constant 0 : index
    %c0_10 = arith.constant 0 : index
    %10 = vector.load %arg5[%c0_9, %c0_10] : memref<1x128xf32, #tpu.memory_space<vmem>>, vector<1x128xf32>
    %11 = vector.broadcast %10 : vector<1x128xf32> to vector<8x128xf32>
    %12 = arith.addf %9, %11 : vector<8x128xf32>
    %c0_11 = arith.constant 0 : index
    %c0_12 = arith.constant 0 : index
    %13 = vector.load %arg6[%c0_11, %c0_12] : memref<128x128xf32, #tpu.memory_space<vmem>>, vector<128x128xf32>
    %c0_13 = arith.constant 0 : index
    %c0_14 = arith.constant 0 : index
    %14 = vector.load %arg7[%c0_13, %c0_14] : memref<1x128xf32, #tpu.memory_space<vmem>>, vector<1x128xf32>
    %c0_15 = arith.constant 0 : index
    %c0_16 = arith.constant 0 : index
    %15 = vector.load %arg8[%c0_15, %c0_16] : memref<1x128xf32, #tpu.memory_space<vmem>>, vector<1x128xf32>
    %16 = arith.mulf %12, %12 : vector<8x128xf32>
    %cst_17 = arith.constant dense<0.000000e+00> : vector<8xf32>
    %17 = vector.multi_reduction <add>, %16, %cst_17 [1] : vector<8x128xf32> to vector<8xf32>
    %18 = vector.shape_cast %17 : vector<8xf32> to vector<8x1xf32>
    %cst_18 = arith.constant 1.000000e-30 : f32
    %19 = vector.broadcast %cst_18 : f32 to vector<8x1xf32>
    %20 = arith.maximumf %18, %19 : vector<8x1xf32>
    %21 = math.rsqrt %20 : vector<8x1xf32>
    %cst_19 = arith.constant 2.000000e+00 : f32
    %22 = vector.broadcast %cst_19 : f32 to vector<8x1xf32>
    %23 = arith.mulf %22, %20 : vector<8x1xf32>
    %24 = arith.mulf %23, %21 : vector<8x1xf32>
    %cst_20 = arith.constant 6.000000e+01 : f32
    %25 = vector.broadcast %cst_20 : f32 to vector<8x1xf32>
    %26 = arith.minimumf %24, %25 : vector<8x1xf32>
    %27 = math.exp %26 : vector<8x1xf32>
    %cst_21 = arith.constant 1.000000e+00 : f32
    %28 = vector.broadcast %cst_21 : f32 to vector<8x1xf32>
    %29 = arith.divf %28, %27 : vector<8x1xf32>
    %30 = arith.addf %27, %29 : vector<8x1xf32>
    %cst_22 = arith.constant 5.000000e-01 : f32
    %31 = vector.broadcast %cst_22 : f32 to vector<8x1xf32>
    %32 = arith.mulf %31, %30 : vector<8x1xf32>
    %33 = arith.subf %27, %29 : vector<8x1xf32>
    %cst_23 = arith.constant 5.000000e-01 : f32
    %34 = vector.broadcast %cst_23 : f32 to vector<8x1xf32>
    %35 = arith.mulf %34, %33 : vector<8x1xf32>
    %cst_24 = arith.constant dense<0.000000e+00> : vector<8x128xf32>
    %36 = tpu.matmul %12, %13, %cst_24 {dimension_numbers = #tpu.dot_dimension_numbers<[1], [0], [0], [1], [0, 0, 1, 1], [], []>} : vector<8x128xf32>, vector<128x128xf32>, vector<8x128xf32> -> vector<8x128xf32>
    %37 = arith.mulf %35, %21 : vector<8x1xf32>
    %38 = vector.broadcast %37 : vector<8x1xf32> to vector<8x128xf32>
    %39 = arith.mulf %38, %36 : vector<8x128xf32>
    %40 = vector.broadcast %32 : vector<8x1xf32> to vector<8x128xf32>
    %41 = vector.broadcast %14 : vector<1x128xf32> to vector<8x128xf32>
    %42 = arith.mulf %40, %41 : vector<8x128xf32>
    %43 = arith.subf %39, %42 : vector<8x128xf32>
    %cst_25 = arith.constant 0.000000e+00 : f32
    %44 = vector.broadcast %cst_25 : f32 to vector<8x128xf32>
    %45 = arith.cmpf oge, %43, %44 : vector<8x128xf32>
    %cst_26 = arith.constant 1.000000e+00 : f32
    %cst_27 = arith.constant -1.000000e+00 : f32
    %46 = vector.broadcast %cst_26 : f32 to vector<8x128xf32>
    %47 = vector.broadcast %cst_27 : f32 to vector<8x128xf32>
    %48 = arith.select %45, %46, %47 : vector<8x128xi1>, vector<8x128xf32>
    %49 = math.absf %43 : vector<8x128xf32>
    %50 = arith.mulf %49, %49 : vector<8x128xf32>
    %cst_28 = arith.constant 1.000000e+00 : f32
    %51 = vector.broadcast %cst_28 : f32 to vector<8x128xf32>
    %52 = arith.addf %50, %51 : vector<8x128xf32>
    %53 = math.sqrt %52 : vector<8x128xf32>
    %54 = arith.addf %49, %53 : vector<8x128xf32>
    %55 = math.log %54 : vector<8x128xf32>
    %56 = arith.mulf %48, %55 : vector<8x128xf32>
    %57 = vector.broadcast %15 : vector<1x128xf32> to vector<8x128xf32>
    %58 = arith.mulf %57, %56 : vector<8x128xf32>
    %cst_29 = arith.constant 1.000000e+00 : f32
    %59 = vector.broadcast %cst_29 : f32 to vector<8x128xf32>
    %60 = arith.mulf %59, %58 : vector<8x128xf32>
    %cst_30 = arith.constant -3.000000e+01 : f32
    %61 = vector.broadcast %cst_30 : f32 to vector<8x128xf32>
    %62 = arith.maximumf %60, %61 : vector<8x128xf32>
    %cst_31 = arith.constant 3.000000e+01 : f32
    %63 = vector.broadcast %cst_31 : f32 to vector<8x128xf32>
    %64 = arith.minimumf %62, %63 : vector<8x128xf32>
    %65 = math.exp %64 : vector<8x128xf32>
    %cst_32 = arith.constant 1.000000e+00 : f32
    %66 = vector.broadcast %cst_32 : f32 to vector<8x128xf32>
    %67 = arith.divf %66, %65 : vector<8x128xf32>
    %68 = arith.subf %65, %67 : vector<8x128xf32>
    %cst_33 = arith.constant 5.000000e-01 : f32
    %69 = vector.broadcast %cst_33 : f32 to vector<8x128xf32>
    %70 = arith.mulf %69, %68 : vector<8x128xf32>
    %71 = arith.mulf %70, %70 : vector<8x128xf32>
    %cst_34 = arith.constant dense<0.000000e+00> : vector<8xf32>
    %72 = vector.multi_reduction <add>, %71, %cst_34 [1] : vector<8x128xf32> to vector<8xf32>
    %73 = vector.shape_cast %72 : vector<8xf32> to vector<8x1xf32>
    %cst_35 = arith.constant 1.000000e-30 : f32
    %74 = vector.broadcast %cst_35 : f32 to vector<8x1xf32>
    %75 = arith.maximumf %73, %74 : vector<8x1xf32>
    %76 = math.rsqrt %75 : vector<8x1xf32>
    %cst_36 = arith.constant 1.000000e+00 : f32
    %77 = vector.broadcast %cst_36 : f32 to vector<8x1xf32>
    %78 = arith.mulf %77, %75 : vector<8x1xf32>
    %79 = arith.mulf %78, %76 : vector<8x1xf32>
    %80 = arith.mulf %79, %79 : vector<8x1xf32>
    %cst_37 = arith.constant 1.000000e+00 : f32
    %81 = vector.broadcast %cst_37 : f32 to vector<8x1xf32>
    %82 = arith.addf %80, %81 : vector<8x1xf32>
    %83 = math.sqrt %82 : vector<8x1xf32>
    %84 = arith.addf %79, %83 : vector<8x1xf32>
    %85 = math.log %84 : vector<8x1xf32>
    %cst_38 = arith.constant 5.000000e-01 : f32
    %86 = vector.broadcast %cst_38 : f32 to vector<8x1xf32>
    %87 = arith.mulf %86, %76 : vector<8x1xf32>
    %88 = arith.mulf %85, %87 : vector<8x1xf32>
    %89 = vector.broadcast %88 : vector<8x1xf32> to vector<8x128xf32>
    %90 = arith.mulf %89, %70 : vector<8x128xf32>
    %cst_39 = arith.constant 0.000000e+00 : f32
    %91 = vector.broadcast %cst_39 : f32 to vector<8x128xf32>
    %92 = arith.maximumf %90, %91 : vector<8x128xf32>
    %c0_40 = arith.constant 0 : index
    %c0_41 = arith.constant 0 : index
    %93 = vector.load %arg9[%c0_40, %c0_41] : memref<128x128xf32, #tpu.memory_space<vmem>>, vector<128x128xf32>
    %c0_42 = arith.constant 0 : index
    %c0_43 = arith.constant 0 : index
    %94 = vector.load %arg10[%c0_42, %c0_43] : memref<1x128xf32, #tpu.memory_space<vmem>>, vector<1x128xf32>
    %c0_44 = arith.constant 0 : index
    %c0_45 = arith.constant 0 : index
    %95 = vector.load %arg11[%c0_44, %c0_45] : memref<1x128xf32, #tpu.memory_space<vmem>>, vector<1x128xf32>
    %96 = arith.mulf %92, %92 : vector<8x128xf32>
    %cst_46 = arith.constant dense<0.000000e+00> : vector<8xf32>
    %97 = vector.multi_reduction <add>, %96, %cst_46 [1] : vector<8x128xf32> to vector<8xf32>
    %98 = vector.shape_cast %97 : vector<8xf32> to vector<8x1xf32>
    %cst_47 = arith.constant 1.000000e-30 : f32
    %99 = vector.broadcast %cst_47 : f32 to vector<8x1xf32>
    %100 = arith.maximumf %98, %99 : vector<8x1xf32>
    %101 = math.rsqrt %100 : vector<8x1xf32>
    %cst_48 = arith.constant 2.000000e+00 : f32
    %102 = vector.broadcast %cst_48 : f32 to vector<8x1xf32>
    %103 = arith.mulf %102, %100 : vector<8x1xf32>
    %104 = arith.mulf %103, %101 : vector<8x1xf32>
    %cst_49 = arith.constant 6.000000e+01 : f32
    %105 = vector.broadcast %cst_49 : f32 to vector<8x1xf32>
    %106 = arith.minimumf %104, %105 : vector<8x1xf32>
    %107 = math.exp %106 : vector<8x1xf32>
    %cst_50 = arith.constant 1.000000e+00 : f32
    %108 = vector.broadcast %cst_50 : f32 to vector<8x1xf32>
    %109 = arith.divf %108, %107 : vector<8x1xf32>
    %110 = arith.addf %107, %109 : vector<8x1xf32>
    %cst_51 = arith.constant 5.000000e-01 : f32
    %111 = vector.broadcast %cst_51 : f32 to vector<8x1xf32>
    %112 = arith.mulf %111, %110 : vector<8x1xf32>
    %113 = arith.subf %107, %109 : vector<8x1xf32>
    %cst_52 = arith.constant 5.000000e-01 : f32
    %114 = vector.broadcast %cst_52 : f32 to vector<8x1xf32>
    %115 = arith.mulf %114, %113 : vector<8x1xf32>
    %cst_53 = arith.constant dense<0.000000e+00> : vector<8x128xf32>
    %116 = tpu.matmul %92, %93, %cst_53 {dimension_numbers = #tpu.dot_dimension_numbers<[1], [0], [0], [1], [0, 0, 1, 1], [], []>} : vector<8x128xf32>, vector<128x128xf32>, vector<8x128xf32> -> vector<8x128xf32>
    %117 = arith.mulf %115, %101 : vector<8x1xf32>
    %118 = vector.broadcast %117 : vector<8x1xf32> to vector<8x128xf32>
    %119 = arith.mulf %118, %116 : vector<8x128xf32>
    %120 = vector.broadcast %112 : vector<8x1xf32> to vector<8x128xf32>
    %121 = vector.broadcast %94 : vector<1x128xf32> to vector<8x128xf32>
    %122 = arith.mulf %120, %121 : vector<8x128xf32>
    %123 = arith.subf %119, %122 : vector<8x128xf32>
    %cst_54 = arith.constant 0.000000e+00 : f32
    %124 = vector.broadcast %cst_54 : f32 to vector<8x128xf32>
    %125 = arith.cmpf oge, %123, %124 : vector<8x128xf32>
    %cst_55 = arith.constant 1.000000e+00 : f32
    %cst_56 = arith.constant -1.000000e+00 : f32
    %126 = vector.broadcast %cst_55 : f32 to vector<8x128xf32>
    %127 = vector.broadcast %cst_56 : f32 to vector<8x128xf32>
    %128 = arith.select %125, %126, %127 : vector<8x128xi1>, vector<8x128xf32>
    %129 = math.absf %123 : vector<8x128xf32>
    %130 = arith.mulf %129, %129 : vector<8x128xf32>
    %cst_57 = arith.constant 1.000000e+00 : f32
    %131 = vector.broadcast %cst_57 : f32 to vector<8x128xf32>
    %132 = arith.addf %130, %131 : vector<8x128xf32>
    %133 = math.sqrt %132 : vector<8x128xf32>
    %134 = arith.addf %129, %133 : vector<8x128xf32>
    %135 = math.log %134 : vector<8x128xf32>
    %136 = arith.mulf %128, %135 : vector<8x128xf32>
    %137 = vector.broadcast %95 : vector<1x128xf32> to vector<8x128xf32>
    %138 = arith.mulf %137, %136 : vector<8x128xf32>
    %cst_58 = arith.constant 1.000000e+00 : f32
    %139 = vector.broadcast %cst_58 : f32 to vector<8x128xf32>
    %140 = arith.mulf %139, %138 : vector<8x128xf32>
    %cst_59 = arith.constant -3.000000e+01 : f32
    %141 = vector.broadcast %cst_59 : f32 to vector<8x128xf32>
    %142 = arith.maximumf %140, %141 : vector<8x128xf32>
    %cst_60 = arith.constant 3.000000e+01 : f32
    %143 = vector.broadcast %cst_60 : f32 to vector<8x128xf32>
    %144 = arith.minimumf %142, %143 : vector<8x128xf32>
    %145 = math.exp %144 : vector<8x128xf32>
    %cst_61 = arith.constant 1.000000e+00 : f32
    %146 = vector.broadcast %cst_61 : f32 to vector<8x128xf32>
    %147 = arith.divf %146, %145 : vector<8x128xf32>
    %148 = arith.subf %145, %147 : vector<8x128xf32>
    %cst_62 = arith.constant 5.000000e-01 : f32
    %149 = vector.broadcast %cst_62 : f32 to vector<8x128xf32>
    %150 = arith.mulf %149, %148 : vector<8x128xf32>
    %151 = arith.mulf %150, %150 : vector<8x128xf32>
    %cst_63 = arith.constant dense<0.000000e+00> : vector<8xf32>
    %152 = vector.multi_reduction <add>, %151, %cst_63 [1] : vector<8x128xf32> to vector<8xf32>
    %153 = vector.shape_cast %152 : vector<8xf32> to vector<8x1xf32>
    %cst_64 = arith.constant 1.000000e+00 : f32
    %154 = vector.broadcast %cst_64 : f32 to vector<8x1xf32>
    %155 = arith.mulf %154, %153 : vector<8x1xf32>
    %cst_65 = arith.constant 1.000000e+00 : f32
    %156 = vector.broadcast %cst_65 : f32 to vector<8x1xf32>
    %157 = arith.addf %156, %155 : vector<8x1xf32>
    %158 = math.sqrt %157 : vector<8x1xf32>
    %cst_66 = arith.constant 1.000000e+00 : f32
    %159 = vector.broadcast %cst_66 : f32 to vector<8x1xf32>
    %160 = arith.addf %159, %158 : vector<8x1xf32>
    %161 = vector.broadcast %160 : vector<8x1xf32> to vector<8x128xf32>
    %162 = arith.divf %150, %161 : vector<8x128xf32>
    %c0_67 = arith.constant 0 : index
    %c0_68 = arith.constant 0 : index
    %163 = vector.load %arg12[%c0_67, %c0_68] : memref<8x128xf32, #tpu.memory_space<vmem>>, vector<8x128xf32>
    tpu.vector_store %arg12[%c0_67, %c0_68], %162 {strides = array<i32>} : memref<8x128xf32, #tpu.memory_space<vmem>>, vector<8x128xf32>,
    return
  }
  func.func @transform_0(%arg0: i32) -> (i32, i32) {
    %c0_i32 = arith.constant 0 : i32
    %c0_i32_0 = arith.constant 0 : i32
    return %arg0, %c0_i32 : i32, i32
  }
  func.func @transform_1(%arg0: i32) -> (i32, i32) {
    %c0_i32 = arith.constant 0 : i32
    %c0_i32_0 = arith.constant 0 : i32
    %c0_i32_1 = arith.constant 0 : i32
    return %c0_i32, %c0_i32_0 : i32, i32
  }
  func.func @transform_2(%arg0: i32) -> (i32, i32) {
    %c0_i32 = arith.constant 0 : i32
    %c0_i32_0 = arith.constant 0 : i32
    %c0_i32_1 = arith.constant 0 : i32
    return %c0_i32, %c0_i32_0 : i32, i32
  }
  func.func @transform_3(%arg0: i32) -> (i32, i32) {
    %c0_i32 = arith.constant 0 : i32
    %c0_i32_0 = arith.constant 0 : i32
    %c0_i32_1 = arith.constant 0 : i32
    return %c0_i32, %c0_i32_0 : i32, i32
  }
  func.func @transform_4(%arg0: i32) -> (i32, i32) {
    %c0_i32 = arith.constant 0 : i32
    %c0_i32_0 = arith.constant 0 : i32
    %c0_i32_1 = arith.constant 0 : i32
    return %c0_i32, %c0_i32_0 : i32, i32
  }
  func.func @transform_5(%arg0: i32) -> (i32, i32) {
    %c0_i32 = arith.constant 0 : i32
    %c0_i32_0 = arith.constant 0 : i32
    %c0_i32_1 = arith.constant 0 : i32
    return %c0_i32, %c0_i32_0 : i32, i32
  }
  func.func @transform_6(%arg0: i32) -> (i32, i32) {
    %c0_i32 = arith.constant 0 : i32
    %c0_i32_0 = arith.constant 0 : i32
    %c0_i32_1 = arith.constant 0 : i32
    return %c0_i32, %c0_i32_0 : i32, i32
  }
  func.func @transform_7(%arg0: i32) -> (i32, i32) {
    %c0_i32 = arith.constant 0 : i32
    %c0_i32_0 = arith.constant 0 : i32
    %c0_i32_1 = arith.constant 0 : i32
    return %c0_i32, %c0_i32_0 : i32, i32
  }
  func.func @transform_8(%arg0: i32) -> (i32, i32) {
    %c0_i32 = arith.constant 0 : i32
    %c0_i32_0 = arith.constant 0 : i32
    %c0_i32_1 = arith.constant 0 : i32
    return %c0_i32, %c0_i32_0 : i32, i32
  }
  func.func @transform_9(%arg0: i32) -> (i32, i32) {
    %c0_i32 = arith.constant 0 : i32
    %c0_i32_0 = arith.constant 0 : i32
    %c0_i32_1 = arith.constant 0 : i32
    return %c0_i32, %c0_i32_0 : i32, i32
  }
  func.func @transform_10(%arg0: i32) -> (i32, i32) {
    %c0_i32 = arith.constant 0 : i32
    %c0_i32_0 = arith.constant 0 : i32
    %c0_i32_1 = arith.constant 0 : i32
    return %c0_i32, %c0_i32_0 : i32, i32
  }
  func.func @transform_11(%arg0: i32) -> (i32, i32) {
    %c0_i32 = arith.constant 0 : i32
    %c0_i32_0 = arith.constant 0 : i32
    return %arg0, %c0_i32 : i32, i32
  }
}

</mosaic_0001>

<llo_original>
// kernel: _forward.1
$region0: #{_forward.1}
  #allocation0 [shape = 'u32[]', space=smem, size = 0x4, offset = 0x4, fixed_abs, tag = 'smem constant byte address 0x4 - core index']
  #allocation1 [shape = 'u32[144,128]{1,0:T(1,128)}', space=vmem, size = 0x12000, scoped, tag = 'internal scratch']
  %s0 = inlined_call_operand.vmem [shape: f32[8,16], index: 0, kind: input, shape index: {}]
  %s1 = inlined_call_operand.vmem [shape: f32[16,128], index: 1, kind: input, shape index: {}]
  %s2 = inlined_call_operand.vmem [shape: f32[1,128], index: 2, kind: input, shape index: {}]
  %s3 = inlined_call_operand.vmem [shape: f32[128,128], index: 3, kind: input, shape index: {}]
  %s4 = inlined_call_operand.vmem [shape: f32[1,128], index: 4, kind: input, shape index: {}]
  %s5 = inlined_call_operand.vmem [shape: f32[128,128], index: 5, kind: input, shape index: {}]
  %s6 = inlined_call_operand.vmem [shape: f32[1,128], index: 6, kind: input, shape index: {}]
  %s7 = inlined_call_operand.vmem [shape: f32[1,128], index: 7, kind: input, shape index: {}]
  %s8 = inlined_call_operand.vmem [shape: f32[128,128], index: 8, kind: input, shape index: {}]
  %s9 = inlined_call_operand.vmem [shape: f32[1,128], index: 9, kind: input, shape index: {}]
  %s10 = inlined_call_operand.vmem [shape: f32[1,128], index: 10, kind: input, shape index: {}]
  %s11 = inlined_call_operand.vmem [shape: f32[8,128], index: 11, kind: output, shape index: {}]
  %s12 = sld [smem:[#allocation0]]
  $region54: #{_forward.1} parent=0
    _
  %s14 = ssub.s32 1, %s12
  %s15 = scalar_select 0, %s14, %s12
  // Predicated region
  $region2: #{_forward.1} parent=0 // pred_check
    _
  $region3: #{_forward.1} parent=0 // pred_check_branch
    %17 = sbr.rel (0) target = $region5
  $region4: #{_forward.1} parent=0 // pred_region
    _
  $region5: #{_forward.1} parent=0 // pred_fallthru
    _
  // Predicated region
  $region6: #{_forward.1} parent=0 // pred_check
    _
  $region7: #{_forward.1} parent=0 // pred_check_branch
    %19 = sbr.rel (0) target = $region9
  $region8: #{_forward.1} parent=0 // pred_region
    _
  $region9: #{_forward.1} parent=0 // pred_fallthru
    _
  // Predicated region
  $region10: #{_forward.1} parent=0 // pred_check
    _
  $region11: #{_forward.1} parent=0 // pred_check_branch
    %21 = sbr.rel (0) target = $region13
  $region12: #{_forward.1} parent=0 // pred_region
    _
  $region13: #{_forward.1} parent=0 // pred_fallthru
    _
  // Predicated region
  $region14: #{_forward.1} parent=0 // pred_check
    _
  $region15: #{_forward.1} parent=0 // pred_check_branch
    %23 = sbr.rel (0) target = $region17
  $region16: #{_forward.1} parent=0 // pred_region
    _
  $region17: #{_forward.1} parent=0 // pred_fallthru
    _
  // Predicated region
  $region18: #{_forward.1} parent=0 // pred_check
    _
  $region19: #{_forward.1} parent=0 // pred_check_branch
    %25 = sbr.rel (0) target = $region21
  $region20: #{_forward.1} parent=0 // pred_region
    _
  $region21: #{_forward.1} parent=0 // pred_fallthru
    _
  // Predicated region
  $region22: #{_forward.1} parent=0 // pred_check
    _
  $region23: #{_forward.1} parent=0 // pred_check_branch
    %27 = sbr.rel (0) target = $region25
  $region24: #{_forward.1} parent=0 // pred_region
    _
  $region25: #{_forward.1} parent=0 // pred_fallthru
    _
  // Predicated region
  $region26: #{_forward.1} parent=0 // pred_check
    _
  $region27: #{_forward.1} parent=0 // pred_check_branch
    %29 = sbr.rel (0) target = $region29
  $region28: #{_forward.1} parent=0 // pred_region
    _
  $region29: #{_forward.1} parent=0 // pred_fallthru
    _
  // Predicated region
  $region30: #{_forward.1} parent=0 // pred_check
    _
  $region31: #{_forward.1} parent=0 // pred_check_branch
    %31 = sbr.rel (0) target = $region33
  $region32: #{_forward.1} parent=0 // pred_region
    _
  $region33: #{_forward.1} parent=0 // pred_fallthru
    _
  // Predicated region
  $region34: #{_forward.1} parent=0 // pred_check
    _
  $region35: #{_forward.1} parent=0 // pred_check_branch
    %33 = sbr.rel (0) target = $region37
  $region36: #{_forward.1} parent=0 // pred_region
    _
  $region37: #{_forward.1} parent=0 // pred_fallthru
    _
  // Predicated region
  $region38: #{_forward.1} parent=0 // pred_check
    _
  $region39: #{_forward.1} parent=0 // pred_check_branch
    %35 = sbr.rel (0) target = $region41
  $region40: #{_forward.1} parent=0 // pred_region
    _
  $region41: #{_forward.1} parent=0 // pred_fallthru
    _
  // Predicated region
  $region42: #{_forward.1} parent=0 // pred_check
    _
  $region43: #{_forward.1} parent=0 // pred_check_branch
    %37 = sbr.rel (0) target = $region45
  $region44: #{_forward.1} parent=0 // pred_region
    _
  $region45: #{_forward.1} parent=0 // pred_fallthru
    _
  %v38 = vld [vmem:[%s0] sm:$0xff]
  %v39 = vld [vmem:[%s1] sm:$0xff]
  %v40 = vld [vmem:[%s1 + $0x8] sm:$0xff]
  %v41 = vld [vmem:[%s2] sm:$0x1]
  %v43 = vlaneseq
  %v44 = vshrl.u32 %v43, 7
  %v45 = vsub.s32 0, %v44
  %v46 = vrot.slane %v41, %v45
  %vm48 = vcmask 130048
  %v50 = vsel %vm48, %v38, 0
  %52 = vmatprep.subr.mxu0 0.0
  %53 = vmatpush1.msra.mxu0 %v39
  %54 = vmatprep.subr.mxu0 0.0
  %55 = vmatpush1.msra.mxu0 %v40
  %56 = vmatprep.subr.mxu0 0.0
  %57 = vmatpush1.msra.mxu0 0.0
  %58 = vmatprep.subr.mxu0 0.0
  %59 = vmatpush1.msra.mxu0 0.0
  %60 = vmatprep.subr.mxu0 0.0
  %61 = vmatpush1.msra.mxu0 0.0
  %62 = vmatprep.subr.mxu0 0.0
  %63 = vmatpush1.msra.mxu0 0.0
  %64 = vmatprep.subr.mxu0 0.0
  %65 = vmatpush1.msra.mxu0 0.0
  %66 = vmatprep.subr.mxu0 0.0
  %67 = vmatpush1.msra.mxu0 0.0
  %68 = vmatprep.subr.mxu0 0.0
  %69 = vmatpush1.msra.mxu0 0.0
  %70 = vmatprep.subr.mxu0 0.0
  %71 = vmatpush1.msra.mxu0 0.0
  %72 = vmatprep.subr.mxu0 0.0
  %73 = vmatpush1.msra.mxu0 0.0
  %74 = vmatprep.subr.mxu0 0.0
  %75 = vmatpush1.msra.mxu0 0.0
  %76 = vmatprep.subr.mxu0 0.0
  %77 = vmatpush1.msra.mxu0 0.0
  %78 = vmatprep.subr.mxu0 0.0
  %79 = vmatpush1.msra.mxu0 0.0
  %80 = vmatprep.subr.mxu0 0.0
  %81 = vmatpush1.msra.mxu0 0.0
  %82 = vmatprep.subr.mxu0 0.0
  %83 = vmatpush1.msra.mxu0 0.0
  %84 = vmatprep.subr.mxu0 0.0
  %85 = vmatpush1.msra.mxu0 0.0
  %86 = vmatprep.subr.mxu0 0.0
  %87 = vmatpush1.msra.mxu0 0.0
  %88 = vmatprep.subr.mxu0 0.0
  %89 = vmatpush1.msra.mxu0 0.0
  %90 = vmatprep.subr.mxu0 0.0
  %91 = vmatpush1.msra.mxu0 0.0
  %92 = vmatprep.subr.mxu0 0.0
  %93 = vmatpush1.msra.mxu0 0.0
  %94 = vmatprep.subr.mxu0 0.0
  %95 = vmatpush1.msra.mxu0 0.0
  %96 = vmatprep.subr.mxu0 0.0
  %97 = vmatpush1.msra.mxu0 0.0
  %98 = vmatprep.subr.mxu0 0.0
  %99 = vmatpush1.msra.mxu0 0.0
  %100 = vmatprep.subr.mxu0 0.0
  %101 = vmatpush1.msra.mxu0 0.0
  %102 = vmatprep.subr.mxu0 0.0
  %103 = vmatpush1.msra.mxu0 0.0
  %104 = vmatprep.subr.mxu0 0.0
  %105 = vmatpush1.msra.mxu0 0.0
  %106 = vmatprep.subr.mxu0 0.0
  %107 = vmatpush1.msra.mxu0 0.0
  %108 = vmatprep.subr.mxu0 0.0
  %109 = vmatpush1.msra.mxu0 0.0
  %110 = vmatprep.subr.mxu0 0.0
  %111 = vmatpush1.msra.mxu0 0.0
  %112 = vmatprep.subr.mxu0 0.0
  %113 = vmatpush1.msra.mxu0 0.0
  %114 = vmatprep.subr.mxu0 0.0
  %115 = vmatpush1.msra.mxu0 0.0
  %116 = vmatprep.mubr.f32.mxu0 0.0
  %117 = vmatmul.mubr.f32.gmra.mrb[0].mxu0 %v50
  %v118 = vpop.f32.mrb[0].mxu0
  %v119 = vadd.f32 %v46, %v118
  %v120 = vpop.f32.mrb[0].mxu0
  %121 = vdwg.mxu0
  %v122 = vmax.f32 %v119, 0.0
  %v123 = vld [vmem:[%s3] sm:$0xff]
  %v124 = vld [vmem:[%s3 + $0x8] sm:$0xff]
  %v125 = vld [vmem:[%s3 + $0x10] sm:$0xff]
  %v126 = vld [vmem:[%s3 + $0x18] sm:$0xff]
  %v127 = vld [vmem:[%s3 + $0x20] sm:$0xff]
  %v128 = vld [vmem:[%s3 + $0x28] sm:$0xff]
  %v129 = vld [vmem:[%s3 + $0x30] sm:$0xff]
  %v130 = vld [vmem:[%s3 + $0x38] sm:$0xff]
  %v131 = vld [vmem:[%s3 + $0x40] sm:$0xff]
  %v132 = vld [vmem:[%s3 + $0x48] sm:$0xff]
  %v133 = vld [vmem:[%s3 + $0x50] sm:$0xff]
  %v134 = vld [vmem:[%s3 + $0x58] sm:$0xff]
  %v135 = vld [vmem:[%s3 + $0x60] sm:$0xff]
  %v136 = vld [vmem:[%s3 + $0x68] sm:$0xff]
  %v137 = vld [vmem:[%s3 + $0x70] sm:$0xff]
  %v138 = vld [vmem:[%s3 + $0x78] sm:$0xff]
  %v139 = vld [vmem:[%s4] sm:$0x1]
  %v141 = vlaneseq
  %v142 = vshrl.u32 %v141, 7
  %v143 = vsub.s32 0, %v142
  %v144 = vrot.slane %v139, %v143
  %146 = vmatprep.subr.mxu0 0.0
  %147 = vmatpush1.msra.mxu0 %v123
  %148 = vmatprep.subr.mxu0 0.0
  %149 = vmatpush1.msra.mxu0 %v124
  %150 = vmatprep.subr.mxu0 0.0
  %151 = vmatpush1.msra.mxu0 %v125
  %152 = vmatprep.subr.mxu0 0.0
  %153 = vmatpush1.msra.mxu0 %v126
  %154 = vmatprep.subr.mxu0 0.0
  %155 = vmatpush1.msra.mxu0 %v127
  %156 = vmatprep.subr.mxu0 0.0
  %157 = vmatpush1.msra.mxu0 %v128
  %158 = vmatprep.subr.mxu0 0.0
  %159 = vmatpush1.msra.mxu0 %v129
  %160 = vmatprep.subr.mxu0 0.0
  %161 = vmatpush1.msra.mxu0 %v130
  %162 = vmatprep.subr.mxu0 0.0
  %163 = vmatpush1.msra.mxu0 %v131
  %164 = vmatprep.subr.mxu0 0.0
  %165 = vmatpush1.msra.mxu0 %v132
  %166 = vmatprep.subr.mxu0 0.0
  %167 = vmatpush1.msra.mxu0 %v133
  %168 = vmatprep.subr.mxu0 0.0
  %169 = vmatpush1.msra.mxu0 %v134
  %170 = vmatprep.subr.mxu0 0.0
  %171 = vmatpush1.msra.mxu0 %v135
  %172 = vmatprep.subr.mxu0 0.0
  %173 = vmatpush1.msra.mxu0 %v136
  %174 = vmatprep.subr.mxu0 0.0
  %175 = vmatpush1.msra.mxu0 %v137
  %176 = vmatprep.subr.mxu0 0.0
  %177 = vmatpush1.msra.mxu0 %v138
  %178 = vmatprep.subr.mxu0 0.0
  %179 = vmatpush1.msra.mxu0 0.0
  %180 = vmatprep.subr.mxu0 0.0
  %181 = vmatpush1.msra.mxu0 0.0
  %182 = vmatprep.subr.mxu0 0.0
  %183 = vmatpush1.msra.mxu0 0.0
  %184 = vmatprep.subr.mxu0 0.0
  %185 = vmatpush1.msra.mxu0 0.0
  %186 = vmatprep.subr.mxu0 0.0
  %187 = vmatpush1.msra.mxu0 0.0
  %188 = vmatprep.subr.mxu0 0.0
  %189 = vmatpush1.msra.mxu0 0.0
  %190 = vmatprep.subr.mxu0 0.0
  %191 = vmatpush1.msra.mxu0 0.0
  %192 = vmatprep.subr.mxu0 0.0
  %193 = vmatpush1.msra.mxu0 0.0
  %194 = vmatprep.subr.mxu0 0.0
  %195 = vmatpush1.msra.mxu0 0.0
  %196 = vmatprep.subr.mxu0 0.0
  %197 = vmatpush1.msra.mxu0 0.0
  %198 = vmatprep.subr.mxu0 0.0
  %199 = vmatpush1.msra.mxu0 0.0
  %200 = vmatprep.subr.mxu0 0.0
  %201 = vmatpush1.msra.mxu0 0.0
  %202 = vmatprep.subr.mxu0 0.0
  %203 = vmatpush1.msra.mxu0 0.0
  %204 = vmatprep.subr.mxu0 0.0
  %205 = vmatpush1.msra.mxu0 0.0
  %206 = vmatprep.subr.mxu0 0.0
  %207 = vmatpush1.msra.mxu0 0.0
  %208 = vmatprep.subr.mxu0 0.0
  %209 = vmatpush1.msra.mxu0 0.0
  %210 = vmatprep.mubr.f32.mxu0 0.0
  %211 = vmatmul.mubr.f32.gmra.mrb[0].mxu0 %v122
  %v212 = vpop.f32.mrb[0].mxu0
  %v213 = vadd.f32 %v144, %v212
  %v214 = vpop.f32.mrb[0].mxu0
  %215 = vdwg.mxu0
  %v216 = vld [vmem:[%s5] sm:$0xff]
  %v217 = vld [vmem:[%s5 + $0x8] sm:$0xff]
  %v218 = vld [vmem:[%s5 + $0x10] sm:$0xff]
  %v219 = vld [vmem:[%s5 + $0x18] sm:$0xff]
  %v220 = vld [vmem:[%s5 + $0x20] sm:$0xff]
  %v221 = vld [vmem:[%s5 + $0x28] sm:$0xff]
  %v222 = vld [vmem:[%s5 + $0x30] sm:$0xff]
  %v223 = vld [vmem:[%s5 + $0x38] sm:$0xff]
  %v224 = vld [vmem:[%s5 + $0x40] sm:$0xff]
  %v225 = vld [vmem:[%s5 + $0x48] sm:$0xff]
  %v226 = vld [vmem:[%s5 + $0x50] sm:$0xff]
  %v227 = vld [vmem:[%s5 + $0x58] sm:$0xff]
  %v228 = vld [vmem:[%s5 + $0x60] sm:$0xff]
  %v229 = vld [vmem:[%s5 + $0x68] sm:$0xff]
  %v230 = vld [vmem:[%s5 + $0x70] sm:$0xff]
  %v231 = vld [vmem:[%s5 + $0x78] sm:$0xff]
  %v232 = vld [vmem:[%s6] sm:$0x1]
  %v233 = vld [vmem:[%s7] sm:$0x1]
  %v234 = vmul.f32 %v213, %v213
  %235 = vadd.xlane.f32.xlu0 %v234
  %v236 = vpop.xlane.xlu0 %235
  %v237 = vmax.f32 %v236, 1e-30
  %v238 = vrsqrt.pop %v237
  %v239 = vmul.f32 %v237, 2.0
  %v240 = vmul.f32 %v239, %v238
  %v241 = vmin.f32 %v240, 60.0
  %v242 = vmul.f32 %v241, 1.442695
  %v243 = vpow.pop %v242
  %v244 = vrcp.pop %v243
  %v245 = vmul.f32 1.0, %v244
  %v246 = vadd.f32 %v243, %v245
  %v247 = vmul.f32 %v246, 0.5
  %v248 = vsub.f32 %v243, %v245
  %v249 = vmul.f32 %v248, 0.5
  %250 = vmatprep.subr.mxu0 0.0
  %251 = vmatpush1.msra.mxu0 %v216
  %252 = vmatprep.subr.mxu0 0.0
  %253 = vmatpush1.msra.mxu0 %v217
  %254 = vmatprep.subr.mxu0 0.0
  %255 = vmatpush1.msra.mxu0 %v218
  %256 = vmatprep.subr.mxu0 0.0
  %257 = vmatpush1.msra.mxu0 %v219
  %258 = vmatprep.subr.mxu0 0.0
  %259 = vmatpush1.msra.mxu0 %v220
  %260 = vmatprep.subr.mxu0 0.0
  %261 = vmatpush1.msra.mxu0 %v221
  %262 = vmatprep.subr.mxu0 0.0
  %263 = vmatpush1.msra.mxu0 %v222
  %264 = vmatprep.subr.mxu0 0.0
  %265 = vmatpush1.msra.mxu0 %v223
  %266 = vmatprep.subr.mxu0 0.0
  %267 = vmatpush1.msra.mxu0 %v224
  %268 = vmatprep.subr.mxu0 0.0
  %269 = vmatpush1.msra.mxu0 %v225
  %270 = vmatprep.subr.mxu0 0.0
  %271 = vmatpush1.msra.mxu0 %v226
  %272 = vmatprep.subr.mxu0 0.0
  %273 = vmatpush1.msra.mxu0 %v227
  %274 = vmatprep.subr.mxu0 0.0
  %275 = vmatpush1.msra.mxu0 %v228
  %276 = vmatprep.subr.mxu0 0.0
  %277 = vmatpush1.msra.mxu0 %v229
  %278 = vmatprep.subr.mxu0 0.0
  %279 = vmatpush1.msra.mxu0 %v230
  %280 = vmatprep.subr.mxu0 0.0
  %281 = vmatpush1.msra.mxu0 %v231
  %282 = vmatprep.subr.mxu0 0.0
  %283 = vmatpush1.msra.mxu0 0.0
  %284 = vmatprep.subr.mxu0 0.0
  %285 = vmatpush1.msra.mxu0 0.0
  %286 = vmatprep.subr.mxu0 0.0
  %287 = vmatpush1.msra.mxu0 0.0
  %288 = vmatprep.subr.mxu0 0.0
  %289 = vmatpush1.msra.mxu0 0.0
  %290 = vmatprep.subr.mxu0 0.0
  %291 = vmatpush1.msra.mxu0 0.0
  %292 = vmatprep.subr.mxu0 0.0
  %293 = vmatpush1.msra.mxu0 0.0
  %294 = vmatprep.subr.mxu0 0.0
  %295 = vmatpush1.msra.mxu0 0.0
  %296 = vmatprep.subr.mxu0 0.0
  %297 = vmatpush1.msra.mxu0 0.0
  %298 = vmatprep.subr.mxu0 0.0
  %299 = vmatpush1.msra.mxu0 0.0
  %300 = vmatprep.subr.mxu0 0.0
  %301 = vmatpush1.msra.mxu0 0.0
  %302 = vmatprep.subr.mxu0 0.0
  %303 = vmatpush1.msra.mxu0 0.0
  %304 = vmatprep.subr.mxu0 0.0
  %305 = vmatpush1.msra.mxu0 0.0
  %306 = vmatprep.subr.mxu0 0.0
  %307 = vmatpush1.msra.mxu0 0.0
  %308 = vmatprep.subr.mxu0 0.0
  %309 = vmatpush1.msra.mxu0 0.0
  %310 = vmatprep.subr.mxu0 0.0
  %311 = vmatpush1.msra.mxu0 0.0
  %312 = vmatprep.subr.mxu0 0.0
  %313 = vmatpush1.msra.mxu0 0.0
  %314 = vmatprep.mubr.f32.mxu0 0.0
  %315 = vmatmul.mubr.f32.gmra.mrb[0].mxu0 %v213
  %v316 = vpop.f32.mrb[0].mxu0
  %v317 = vadd.f32 0.0, %v316
  %v318 = vpop.f32.mrb[0].mxu0
  %319 = vdwg.mxu0
  %v320 = vmul.f32 %v249, %v238
  %v321 = vmul.f32 %v320, %v317
  %v323 = vlaneseq
  %v324 = vshrl.u32 %v323, 7
  %v325 = vsub.s32 0, %v324
  %v326 = vrot.slane %v232, %v325
  %v328 = vmul.f32 %v247, %v326
  %v329 = vsub.f32 %v321, %v328
  %vm330 = vcmp.ge.f32.partialorder %v329, 0.0
  %v331 = vsel %vm330, 1.0, -1.0
  %v332 = vand.u32 2147483647, %v329
  %v333 = vmul.f32 %v332, %v332
  %v334 = vadd.f32 %v333, 1.0
  %v335 = vrsqrt.pop %v334
  %v336 = vmul.f32 %v334, %v335
  %vm337 = vcmp.eq.f32.partialorder %v334, inf
  %v338 = vsel %vm337, %v334, %v336
  %vm339 = vcmp.eq.f32.partialorder %v334, 0.0
  %v340 = vand.u32 %v334, 2147483648
  %v341 = vsel %vm339, %v340, %v338
  %v342 = vadd.f32 %v332, %v341
  %v343 = vlog2.pop %v342
  %v344 = vmul.f32 %v343, 0.6931472
  %v345 = vmul.f32 %v331, %v344
  %v347 = vlaneseq
  %v348 = vshrl.u32 %v347, 7
  %v349 = vsub.s32 0, %v348
  %v350 = vrot.slane %v233, %v349
  %v352 = vmul.f32 %v350, %v345
  %v353 = vmax.f32 %v352, -30.0
  %v354 = vmin.f32 %v353, 30.0
  %v355 = vmul.f32 %v354, 1.442695
  %v356 = vpow.pop %v355
  %v357 = vrcp.pop %v356
  %v358 = vmul.f32 1.0, %v357
  %v359 = vsub.f32 %v356, %v358
  %v360 = vmul.f32 %v359, 0.5
  %v361 = vmul.f32 %v360, %v360
  %362 = vadd.xlane.f32.xlu0 %v361
  %v363 = vpop.xlane.xlu0 %362
  %v364 = vmax.f32 %v363, 1e-30
  %v365 = vrsqrt.pop %v364
  %v366 = vmul.f32 %v364, %v365
  %v367 = vmul.f32 %v366, %v366
  %v368 = vadd.f32 %v367, 1.0
  %v369 = vrsqrt.pop %v368
  %v370 = vmul.f32 %v368, %v369
  %vm371 = vcmp.eq.f32.partialorder %v368, inf
  %v372 = vsel %vm371, %v368, %v370
  %vm373 = vcmp.eq.f32.partialorder %v368, 0.0
  %v374 = vand.u32 %v368, 2147483648
  %v375 = vsel %vm373, %v374, %v372
  %v376 = vadd.f32 %v366, %v375
  %v377 = vlog2.pop %v376
  %v378 = vmul.f32 %v377, 0.6931472
  %v379 = vmul.f32 %v365, 0.5
  %v380 = vmul.f32 %v378, %v379
  %v381 = vmul.f32 %v380, %v360
  %v382 = vmax.f32 %v381, 0.0
  %v383 = vld [vmem:[%s8] sm:$0xff]
  %v384 = vld [vmem:[%s8 + $0x8] sm:$0xff]
  %v385 = vld [vmem:[%s8 + $0x10] sm:$0xff]
  %v386 = vld [vmem:[%s8 + $0x18] sm:$0xff]
  %v387 = vld [vmem:[%s8 + $0x20] sm:$0xff]
  %v388 = vld [vmem:[%s8 + $0x28] sm:$0xff]
  %v389 = vld [vmem:[%s8 + $0x30] sm:$0xff]
  %v390 = vld [vmem:[%s8 + $0x38] sm:$0xff]
  %v391 = vld [vmem:[%s8 + $0x40] sm:$0xff]
  %v392 = vld [vmem:[%s8 + $0x48] sm:$0xff]
  %v393 = vld [vmem:[%s8 + $0x50] sm:$0xff]
  %v394 = vld [vmem:[%s8 + $0x58] sm:$0xff]
  %v395 = vld [vmem:[%s8 + $0x60] sm:$0xff]
  %v396 = vld [vmem:[%s8 + $0x68] sm:$0xff]
  %v397 = vld [vmem:[%s8 + $0x70] sm:$0xff]
  %v398 = vld [vmem:[%s8 + $0x78] sm:$0xff]
  %v399 = vld [vmem:[%s9] sm:$0x1]
  %v400 = vld [vmem:[%s10] sm:$0x1]
  %v401 = vmul.f32 %v382, %v382
  %402 = vadd.xlane.f32.xlu0 %v401
  %v403 = vpop.xlane.xlu0 %402
  %v404 = vmax.f32 %v403, 1e-30
  %v405 = vrsqrt.pop %v404
  %v406 = vmul.f32 %v404, 2.0
  %v407 = vmul.f32 %v406, %v405
  %v408 = vmin.f32 %v407, 60.0
  %v409 = vmul.f32 %v408, 1.442695
  %v410 = vpow.pop %v409
  %v411 = vrcp.pop %v410
  %v412 = vmul.f32 1.0, %v411
  %v413 = vadd.f32 %v410, %v412
  %v414 = vmul.f32 %v413, 0.5
  %v415 = vsub.f32 %v410, %v412
  %v416 = vmul.f32 %v415, 0.5
  %417 = vmatprep.subr.mxu0 0.0
  %418 = vmatpush1.msra.mxu0 %v383
  %419 = vmatprep.subr.mxu0 0.0
  %420 = vmatpush1.msra.mxu0 %v384
  %421 = vmatprep.subr.mxu0 0.0
  %422 = vmatpush1.msra.mxu0 %v385
  %423 = vmatprep.subr.mxu0 0.0
  %424 = vmatpush1.msra.mxu0 %v386
  %425 = vmatprep.subr.mxu0 0.0
  %426 = vmatpush1.msra.mxu0 %v387
  %427 = vmatprep.subr.mxu0 0.0
  %428 = vmatpush1.msra.mxu0 %v388
  %429 = vmatprep.subr.mxu0 0.0
  %430 = vmatpush1.msra.mxu0 %v389
  %431 = vmatprep.subr.mxu0 0.0
  %432 = vmatpush1.msra.mxu0 %v390
  %433 = vmatprep.subr.mxu0 0.0
  %434 = vmatpush1.msra.mxu0 %v391
  %435 = vmatprep.subr.mxu0 0.0
  %436 = vmatpush1.msra.mxu0 %v392
  %437 = vmatprep.subr.mxu0 0.0
  %438 = vmatpush1.msra.mxu0 %v393
  %439 = vmatprep.subr.mxu0 0.0
  %440 = vmatpush1.msra.mxu0 %v394
  %441 = vmatprep.subr.mxu0 0.0
  %442 = vmatpush1.msra.mxu0 %v395
  %443 = vmatprep.subr.mxu0 0.0
  %444 = vmatpush1.msra.mxu0 %v396
  %445 = vmatprep.subr.mxu0 0.0
  %446 = vmatpush1.msra.mxu0 %v397
  %447 = vmatprep.subr.mxu0 0.0
  %448 = vmatpush1.msra.mxu0 %v398
  %449 = vmatprep.subr.mxu0 0.0
  %450 = vmatpush1.msra.mxu0 0.0
  %451 = vmatprep.subr.mxu0 0.0
  %452 = vmatpush1.msra.mxu0 0.0
  %453 = vmatprep.subr.mxu0 0.0
  %454 = vmatpush1.msra.mxu0 0.0
  %455 = vmatprep.subr.mxu0 0.0
  %456 = vmatpush1.msra.mxu0 0.0
  %457 = vmatprep.subr.mxu0 0.0
  %458 = vmatpush1.msra.mxu0 0.0
  %459 = vmatprep.subr.mxu0 0.0
  %460 = vmatpush1.msra.mxu0 0.0
  %461 = vmatprep.subr.mxu0 0.0
  %462 = vmatpush1.msra.mxu0 0.0
  %463 = vmatprep.subr.mxu0 0.0
  %464 = vmatpush1.msra.mxu0 0.0
  %465 = vmatprep.subr.mxu0 0.0
  %466 = vmatpush1.msra.mxu0 0.0
  %467 = vmatprep.subr.mxu0 0.0
  %468 = vmatpush1.msra.mxu0 0.0
  %469 = vmatprep.subr.mxu0 0.0
  %470 = vmatpush1.msra.mxu0 0.0
  %471 = vmatprep.subr.mxu0 0.0
  %472 = vmatpush1.msra.mxu0 0.0
  %473 = vmatprep.subr.mxu0 0.0
  %474 = vmatpush1.msra.mxu0 0.0
  %475 = vmatprep.subr.mxu0 0.0
  %476 = vmatpush1.msra.mxu0 0.0
  %477 = vmatprep.subr.mxu0 0.0
  %478 = vmatpush1.msra.mxu0 0.0
  %479 = vmatprep.subr.mxu0 0.0
  %480 = vmatpush1.msra.mxu0 0.0
  %481 = vmatprep.mubr.f32.mxu0 0.0
  %482 = vmatmul.mubr.f32.gmra.mrb[0].mxu0 %v382
  %v483 = vpop.f32.mrb[0].mxu0
  %v484 = vadd.f32 0.0, %v483
  %v485 = vpop.f32.mrb[0].mxu0
  %486 = vdwg.mxu0
  %v487 = vmul.f32 %v416, %v405
  %v488 = vmul.f32 %v487, %v484
  %v490 = vlaneseq
  %v491 = vshrl.u32 %v490, 7
  %v492 = vsub.s32 0, %v491
  %v493 = vrot.slane %v399, %v492
  %v495 = vmul.f32 %v414, %v493
  %v496 = vsub.f32 %v488, %v495
  %vm497 = vcmp.ge.f32.partialorder %v496, 0.0
  %v498 = vsel %vm497, 1.0, -1.0
  %v499 = vand.u32 2147483647, %v496
  %v500 = vmul.f32 %v499, %v499
  %v501 = vadd.f32 %v500, 1.0
  %v502 = vrsqrt.pop %v501
  %v503 = vmul.f32 %v501, %v502
  %vm504 = vcmp.eq.f32.partialorder %v501, inf
  %v505 = vsel %vm504, %v501, %v503
  %vm506 = vcmp.eq.f32.partialorder %v501, 0.0
  %v507 = vand.u32 %v501, 2147483648
  %v508 = vsel %vm506, %v507, %v505
  %v509 = vadd.f32 %v499, %v508
  %v510 = vlog2.pop %v509
  %v511 = vmul.f32 %v510, 0.6931472
  %v512 = vmul.f32 %v498, %v511
  %v514 = vlaneseq
  %v515 = vshrl.u32 %v514, 7
  %v516 = vsub.s32 0, %v515
  %v517 = vrot.slane %v400, %v516
  %v519 = vmul.f32 %v517, %v512
  %v520 = vmax.f32 %v519, -30.0
  %v521 = vmin.f32 %v520, 30.0
  %v522 = vmul.f32 %v521, 1.442695
  %v523 = vpow.pop %v522
  %v524 = vrcp.pop %v523
  %v525 = vmul.f32 1.0, %v524
  %v526 = vsub.f32 %v523, %v525
  %v527 = vmul.f32 %v526, 0.5
  %v528 = vmul.f32 %v527, %v527
  %529 = vadd.xlane.f32.xlu0 %v528
  %v530 = vpop.xlane.xlu0 %529
  %v531 = vadd.f32 %v530, 1.0
  %v532 = vrsqrt.pop %v531
  %v533 = vmul.f32 %v531, %v532
  %vm534 = vcmp.eq.f32.partialorder %v531, inf
  %v535 = vsel %vm534, %v531, %v533
  %vm536 = vcmp.eq.f32.partialorder %v531, 0.0
  %v537 = vand.u32 %v531, 2147483648
  %v538 = vsel %vm536, %v537, %v535
  %v539 = vadd.f32 %v538, 1.0
  %v540 = vrcp.pop %v539
  %v541 = vmul.f32 %v527, %v540
  %542 = vst [vmem:[%s11] sm:$0xff] %v541
  // Predicated region
  $region46: #{_forward.1} parent=0 // pred_check
    _
  $region47: #{_forward.1} parent=0 // pred_check_branch
    %544 = sbr.rel (0) target = $region49
  $region48: #{_forward.1} parent=0 // pred_region
    _
  $region49: #{_forward.1} parent=0 // pred_fallthru
    _
  // Predicated region
  $region50: #{_forward.1} parent=0 // pred_check
    _
  $region51: #{_forward.1} parent=0 // pred_check_branch
    %546 = sbr.rel (0) target = $region53
  $region52: #{_forward.1} parent=0 // pred_region
    _
  $region53: #{_forward.1} parent=0 // pred_fallthru
    _

// kernel: _forward.1
$region0: #{_forward.1}
  #allocation0 [shape = 'u32[]', space=smem, size = 0x4, offset = 0x4, fixed_abs, tag = 'smem constant byte address 0x4 - core index']
  #allocation1 [shape = 'u32[144,128]{1,0:T(1,128)}', space=vmem, size = 0x12000, scoped, tag = 'internal scratch']
  %s0 = inlined_call_operand.vmem [shape: f32[8,16], index: 0, kind: input, shape index: {}]
  %s1 = inlined_call_operand.vmem [shape: f32[16,128], index: 1, kind: input, shape index: {}]
  %s2 = inlined_call_operand.vmem [shape: f32[1,128], index: 2, kind: input, shape index: {}]
  %s3 = inlined_call_operand.vmem [shape: f32[128,128], index: 3, kind: input, shape index: {}]
  %s4 = inlined_call_operand.vmem [shape: f32[1,128], index: 4, kind: input, shape index: {}]
  %s5 = inlined_call_operand.vmem [shape: f32[128,128], index: 5, kind: input, shape index: {}]
  %s6 = inlined_call_operand.vmem [shape: f32[1,128], index: 6, kind: input, shape index: {}]
  %s7 = inlined_call_operand.vmem [shape: f32[1,128], index: 7, kind: input, shape index: {}]
  %s8 = inlined_call_operand.vmem [shape: f32[128,128], index: 8, kind: input, shape index: {}]
  %s9 = inlined_call_operand.vmem [shape: f32[1,128], index: 9, kind: input, shape index: {}]
  %s10 = inlined_call_operand.vmem [shape: f32[1,128], index: 10, kind: input, shape index: {}]
  %s11 = inlined_call_operand.vmem [shape: f32[8,128], index: 11, kind: output, shape index: {}]
  %s12 = sld [smem:[#allocation0]]
  $region54: #{_forward.1} parent=0
    _
  %s14 = ssub.s32 1, %s12
  %s15 = scalar_select 0, %s14, %s12
  // Predicated region
  $region2: #{_forward.1} parent=0 // pred_check
    _
  $region3: #{_forward.1} parent=0 // pred_check_branch
    %17 = sbr.rel (0) target = $region5
  $region4: #{_forward.1} parent=0 // pred_region
    _
  $region5: #{_forward.1} parent=0 // pred_fallthru
    _
  // Predicated region
  $region6: #{_forward.1} parent=0 // pred_check
    _
  $region7: #{_forward.1} parent=0 // pred_check_branch
    %19 = sbr.rel (0) target = $region9
  $region8: #{_forward.1} parent=0 // pred_region
    _
  $region9: #{_forward.1} parent=0 // pred_fallthru
    _
  // Predicated region
  $region10: #{_forward.1} parent=0 // pred_check
    _
  $region11: #{_forward.1} parent=0 // pred_check_branch
    %21 = sbr.rel (0) target = $region13
  $region12: #{_forward.1} parent=0 // pred_region
    _
  $region13: #{_forward.1} parent=0 // pred_fallthru
    _
  // Predicated region
  $region14: #{_forward.1} parent=0 // pred_check
    _
  $region15: #{_forward.1} parent=0 // pred_check_branch
    %23 = sbr.rel (0) target = $region17
  $region16: #{_forward.1} parent=0 // pred_region
    _
  $region17: #{_forward.1} parent=0 // pred_fallthru
    _
  // Predicated region
  $region18: #{_forward.1} parent=0 // pred_check
    _
  $region19: #{_forward.1} parent=0 // pred_check_branch
    %25 = sbr.rel (0) target = $region21
  $region20: #{_forward.1} parent=0 // pred_region
    _
  $region21: #{_forward.1} parent=0 // pred_fallthru
    _
  // Predicated region
  $region22: #{_forward.1} parent=0 // pred_check
    _
  $region23: #{_forward.1} parent=0 // pred_check_branch
    %27 = sbr.rel (0) target = $region25
  $region24: #{_forward.1} parent=0 // pred_region
    _
  $region25: #{_forward.1} parent=0 // pred_fallthru
    _
  // Predicated region
  $region26: #{_forward.1} parent=0 // pred_check
    _
  $region27: #{_forward.1} parent=0 // pred_check_branch
    %29 = sbr.rel (0) target = $region29
  $region28: #{_forward.1} parent=0 // pred_region
    _
  $region29: #{_forward.1} parent=0 // pred_fallthru
    _
  // Predicated region
  $region30: #{_forward.1} parent=0 // pred_check
    _
  $region31: #{_forward.1} parent=0 // pred_check_branch
    %31 = sbr.rel (0) target = $region33
  $region32: #{_forward.1} parent=0 // pred_region
    _
  $region33: #{_forward.1} parent=0 // pred_fallthru
    _
  // Predicated region
  $region34: #{_forward.1} parent=0 // pred_check
    _
  $region35: #{_forward.1} parent=0 // pred_check_branch
    %33 = sbr.rel (0) target = $region37
  $region36: #{_forward.1} parent=0 // pred_region
    _
  $region37: #{_forward.1} parent=0 // pred_fallthru
    _
  // Predicated region
  $region38: #{_forward.1} parent=0 // pred_check
    _
  $region39: #{_forward.1} parent=0 // pred_check_branch
    %35 = sbr.rel (0) target = $region41
  $region40: #{_forward.1} parent=0 // pred_region
    _
  $region41: #{_forward.1} parent=0 // pred_fallthru
    _
  // Predicated region
  $region42: #{_forward.1} parent=0 // pred_check
    _
  $region43: #{_forward.1} parent=0 // pred_check_branch
    %37 = sbr.rel (0) target = $region45
  $region44: #{_forward.1} parent=0 // pred_region
    _
  $region45: #{_forward.1} parent=0 // pred_fallthru
    _
  %v38 = vld [vmem:[%s0] sm:$0xff]
  %v39 = vld [vmem:[%s1] sm:$0xff]
  %v40 = vld [vmem:[%s1 + $0x8] sm:$0xff]
  %v41 = vld [vmem:[%s2] sm:$0x1]
  %v43 = vlaneseq
  %v44 = vshrl.u32 %v43, 7
  %v45 = vsub.s32 0, %v44
  %v46 = vrot.slane %v41, %v45
  %vm48 = vcmask 130048
  %v50 = vsel %vm48, %v38, 0
  %52 = vmatprep.subr.mxu0 0.0
  %53 = vmatpush1.msra.mxu0 %v39
  %54 = vmatprep.subr.mxu0 0.0
  %55 = vmatpush1.msra.mxu0 %v40
  %56 = vmatprep.subr.mxu0 0.0
  %57 = vmatpush1.msra.mxu0 0.0
  %58 = vmatprep.subr.mxu0 0.0
  %59 = vmatpush1.msra.mxu0 0.0
  %60 = vmatprep.subr.mxu0 0.0
  %61 = vmatpush1.msra.mxu0 0.0
  %62 = vmatprep.subr.mxu0 0.0
  %63 = vmatpush1.msra.mxu0 0.0
  %64 = vmatprep.subr.mxu0 0.0
  %65 = vmatpush1.msra.mxu0 0.0
  %66 = vmatprep.subr.mxu0 0.0
  %67 = vmatpush1.msra.mxu0 0.0
  %68 = vmatprep.subr.mxu0 0.0
  %69 = vmatpush1.msra.mxu0 0.0
  %70 = vmatprep.subr.mxu0 0.0
  %71 = vmatpush1.msra.mxu0 0.0
  %72 = vmatprep.subr.mxu0 0.0
  %73 = vmatpush1.msra.mxu0 0.0
  %74 = vmatprep.subr.mxu0 0.0
  %75 = vmatpush1.msra.mxu0 0.0
  %76 = vmatprep.subr.mxu0 0.0
  %77 = vmatpush1.msra.mxu0 0.0
  %78 = vmatprep.subr.mxu0 0.0
  %79 = vmatpush1.msra.mxu0 0.0
  %80 = vmatprep.subr.mxu0 0.0
  %81 = vmatpush1.msra.mxu0 0.0
  %82 = vmatprep.subr.mxu0 0.0
  %83 = vmatpush1.msra.mxu0 0.0
  %84 = vmatprep.subr.mxu0 0.0
  %85 = vmatpush1.msra.mxu0 0.0
  %86 = vmatprep.subr.mxu0 0.0
  %87 = vmatpush1.msra.mxu0 0.0
  %88 = vmatprep.subr.mxu0 0.0
  %89 = vmatpush1.msra.mxu0 0.0
  %90 = vmatprep.subr.mxu0 0.0
  %91 = vmatpush1.msra.mxu0 0.0
  %92 = vmatprep.subr.mxu0 0.0
  %93 = vmatpush1.msra.mxu0 0.0
  %94 = vmatprep.subr.mxu0 0.0
  %95 = vmatpush1.msra.mxu0 0.0
  %96 = vmatprep.subr.mxu0 0.0
  %97 = vmatpush1.msra.mxu0 0.0
  %98 = vmatprep.subr.mxu0 0.0
  %99 = vmatpush1.msra.mxu0 0.0
  %100 = vmatprep.subr.mxu0 0.0
  %101 = vmatpush1.msra.mxu0 0.0
  %102 = vmatprep.subr.mxu0 0.0
  %103 = vmatpush1.msra.mxu0 0.0
  %104 = vmatprep.subr.mxu0 0.0
  %105 = vmatpush1.msra.mxu0 0.0
  %106 = vmatprep.subr.mxu0 0.0
  %107 = vmatpush1.msra.mxu0 0.0
  %108 = vmatprep.subr.mxu0 0.0
  %109 = vmatpush1.msra.mxu0 0.0
  %110 = vmatprep.subr.mxu0 0.0
  %111 = vmatpush1.msra.mxu0 0.0
  %112 = vmatprep.subr.mxu0 0.0
  %113 = vmatpush1.msra.mxu0 0.0
  %114 = vmatprep.subr.mxu0 0.0
  %115 = vmatpush1.msra.mxu0 0.0
  %116 = vmatprep.mubr.f32.mxu0 0.0
  %117 = vmatmul.mubr.f32.gmra.mrb[0].mxu0 %v50
  %v118 = vpop.f32.mrb[0].mxu0
  %v119 = vadd.f32 %v46, %v118
  %v120 = vpop.f32.mrb[0].mxu0
  %121 = vdwg.mxu0
  %v122 = vmax.f32 %v119, 0.0
  %v123 = vld [vmem:[%s3] sm:$0xff]
  %v124 = vld [vmem:[%s3 + $0x8] sm:$0xff]
  %v125 = vld [vmem:[%s3 + $0x10] sm:$0xff]
  %v126 = vld [vmem:[%s3 + $0x18] sm:$0xff]
  %v127 = vld [vmem:[%s3 + $0x20] sm:$0xff]
  %v128 = vld [vmem:[%s3 + $0x28] sm:$0xff]
  %v129 = vld [vmem:[%s3 + $0x30] sm:$0xff]
  %v130 = vld [vmem:[%s3 + $0x38] sm:$0xff]
  %v131 = vld [vmem:[%s3 + $0x40] sm:$0xff]
  %v132 = vld [vmem:[%s3 + $0x48] sm:$0xff]
  %v133 = vld [vmem:[%s3 + $0x50] sm:$0xff]
  %v134 = vld [vmem:[%s3 + $0x58] sm:$0xff]
  %v135 = vld [vmem:[%s3 + $0x60] sm:$0xff]
  %v136 = vld [vmem:[%s3 + $0x68] sm:$0xff]
  %v137 = vld [vmem:[%s3 + $0x70] sm:$0xff]
  %v138 = vld [vmem:[%s3 + $0x78] sm:$0xff]
  %v139 = vld [vmem:[%s4] sm:$0x1]
  %v141 = vlaneseq
  %v142 = vshrl.u32 %v141, 7
  %v143 = vsub.s32 0, %v142
  %v144 = vrot.slane %v139, %v143
  %146 = vmatprep.subr.mxu0 0.0
  %147 = vmatpush1.msra.mxu0 %v123
  %148 = vmatprep.subr.mxu0 0.0
  %149 = vmatpush1.msra.mxu0 %v124
  %150 = vmatprep.subr.mxu0 0.0
  %151 = vmatpush1.msra.mxu0 %v125
  %152 = vmatprep.subr.mxu0 0.0
  %153 = vmatpush1.msra.mxu0 %v126
  %154 = vmatprep.subr.mxu0 0.0
  %155 = vmatpush1.msra.mxu0 %v127
  %156 = vmatprep.subr.mxu0 0.0
  %157 = vmatpush1.msra.mxu0 %v128
  %158 = vmatprep.subr.mxu0 0.0
  %159 = vmatpush1.msra.mxu0 %v129
  %160 = vmatprep.subr.mxu0 0.0
  %161 = vmatpush1.msra.mxu0 %v130
  %162 = vmatprep.subr.mxu0 0.0
  %163 = vmatpush1.msra.mxu0 %v131
  %164 = vmatprep.subr.mxu0 0.0
  %165 = vmatpush1.msra.mxu0 %v132
  %166 = vmatprep.subr.mxu0 0.0
  %167 = vmatpush1.msra.mxu0 %v133
  %168 = vmatprep.subr.mxu0 0.0
  %169 = vmatpush1.msra.mxu0 %v134
  %170 = vmatprep.subr.mxu0 0.0
  %171 = vmatpush1.msra.mxu0 %v135
  %172 = vmatprep.subr.mxu0 0.0
  %173 = vmatpush1.msra.mxu0 %v136
  %174 = vmatprep.subr.mxu0 0.0
  %175 = vmatpush1.msra.mxu0 %v137
  %176 = vmatprep.subr.mxu0 0.0
  %177 = vmatpush1.msra.mxu0 %v138
  %178 = vmatprep.subr.mxu0 0.0
  %179 = vmatpush1.msra.mxu0 0.0
  %180 = vmatprep.subr.mxu0 0.0
  %181 = vmatpush1.msra.mxu0 0.0
  %182 = vmatprep.subr.mxu0 0.0
  %183 = vmatpush1.msra.mxu0 0.0
  %184 = vmatprep.subr.mxu0 0.0
  %185 = vmatpush1.msra.mxu0 0.0
  %186 = vmatprep.subr.mxu0 0.0
  %187 = vmatpush1.msra.mxu0 0.0
  %188 = vmatprep.subr.mxu0 0.0
  %189 = vmatpush1.msra.mxu0 0.0
  %190 = vmatprep.subr.mxu0 0.0
  %191 = vmatpush1.msra.mxu0 0.0
  %192 = vmatprep.subr.mxu0 0.0
  %193 = vmatpush1.msra.mxu0 0.0
  %194 = vmatprep.subr.mxu0 0.0
  %195 = vmatpush1.msra.mxu0 0.0
  %196 = vmatprep.subr.mxu0 0.0
  %197 = vmatpush1.msra.mxu0 0.0
  %198 = vmatprep.subr.mxu0 0.0
  %199 = vmatpush1.msra.mxu0 0.0
  %200 = vmatprep.subr.mxu0 0.0
  %201 = vmatpush1.msra.mxu0 0.0
  %202 = vmatprep.subr.mxu0 0.0
  %203 = vmatpush1.msra.mxu0 0.0
  %204 = vmatprep.subr.mxu0 0.0
  %205 = vmatpush1.msra.mxu0 0.0
  %206 = vmatprep.subr.mxu0 0.0
  %207 = vmatpush1.msra.mxu0 0.0
  %208 = vmatprep.subr.mxu0 0.0
  %209 = vmatpush1.msra.mxu0 0.0
  %210 = vmatprep.mubr.f32.mxu0 0.0
  %211 = vmatmul.mubr.f32.gmra.mrb[0].mxu0 %v122
  %v212 = vpop.f32.mrb[0].mxu0
  %v213 = vadd.f32 %v144, %v212
  %v214 = vpop.f32.mrb[0].mxu0
  %215 = vdwg.mxu0
  %v216 = vld [vmem:[%s5] sm:$0xff]
  %v217 = vld [vmem:[%s5 + $0x8] sm:$0xff]
  %v218 = vld [vmem:[%s5 + $0x10] sm:$0xff]
  %v219 = vld [vmem:[%s5 + $0x18] sm:$0xff]
  %v220 = vld [vmem:[%s5 + $0x20] sm:$0xff]
  %v221 = vld [vmem:[%s5 + $0x28] sm:$0xff]
  %v222 = vld [vmem:[%s5 + $0x30] sm:$0xff]
  %v223 = vld [vmem:[%s5 + $0x38] sm:$0xff]
  %v224 = vld [vmem:[%s5 + $0x40] sm:$0xff]
  %v225 = vld [vmem:[%s5 + $0x48] sm:$0xff]
  %v226 = vld [vmem:[%s5 + $0x50] sm:$0xff]
  %v227 = vld [vmem:[%s5 + $0x58] sm:$0xff]
  %v228 = vld [vmem:[%s5 + $0x60] sm:$0xff]
  %v229 = vld [vmem:[%s5 + $0x68] sm:$0xff]
  %v230 = vld [vmem:[%s5 + $0x70] sm:$0xff]
  %v231 = vld [vmem:[%s5 + $0x78] sm:$0xff]
  %v232 = vld [vmem:[%s6] sm:$0x1]
  %v233 = vld [vmem:[%s7] sm:$0x1]
  %v234 = vmul.f32 %v213, %v213
  %235 = vadd.xlane.f32.xlu0 %v234
  %v236 = vpop.xlane.xlu0 %235
  %v237 = vmax.f32 %v236, 1e-30
  %v238 = vrsqrt.pop %v237
  %v239 = vmul.f32 %v237, 2.0
  %v240 = vmul.f32 %v239, %v238
  %v241 = vmin.f32 %v240, 60.0
  %v242 = vmul.f32 %v241, 1.442695
  %v243 = vpow.pop %v242
  %v244 = vrcp.pop %v243
  %v245 = vmul.f32 1.0, %v244
  %v246 = vadd.f32 %v243, %v245
  %v247 = vmul.f32 %v246, 0.5
  %v248 = vsub.f32 %v243, %v245
  %v249 = vmul.f32 %v248, 0.5
  %250 = vmatprep.subr.mxu0 0.0
  %251 = vmatpush1.msra.mxu0 %v216
  %252 = vmatprep.subr.mxu0 0.0
  %253 = vmatpush1.msra.mxu0 %v217
  %254 = vmatprep.subr.mxu0 0.0
  %255 = vmatpush1.msra.mxu0 %v218
  %256 = vmatprep.subr.mxu0 0.0
  %257 = vmatpush1.msra.mxu0 %v219
  %258 = vmatprep.subr.mxu0 0.0
  %259 = vmatpush1.msra.mxu0 %v220
  %260 = vmatprep.subr.mxu0 0.0
  %261 = vmatpush1.msra.mxu0 %v221
  %262 = vmatprep.subr.mxu0 0.0
  %263 = vmatpush1.msra.mxu0 %v222
  %264 = vmatprep.subr.mxu0 0.0
  %265 = vmatpush1.msra.mxu0 %v223
  %266 = vmatprep.subr.mxu0 0.0
  %267 = vmatpush1.msra.mxu0 %v224
  %268 = vmatprep.subr.mxu0 0.0
  %269 = vmatpush1.msra.mxu0 %v225
  %270 = vmatprep.subr.mxu0 0.0
  %271 = vmatpush1.msra.mxu0 %v226
  %272 = vmatprep.subr.mxu0 0.0
  %273 = vmatpush1.msra.mxu0 %v227
  %274 = vmatprep.subr.mxu0 0.0
  %275 = vmatpush1.msra.mxu0 %v228
  %276 = vmatprep.subr.mxu0 0.0
  %277 = vmatpush1.msra.mxu0 %v229
  %278 = vmatprep.subr.mxu0 0.0
  %279 = vmatpush1.msra.mxu0 %v230
  %280 = vmatprep.subr.mxu0 0.0
  %281 = vmatpush1.msra.mxu0 %v231
  %282 = vmatprep.subr.mxu0 0.0
  %283 = vmatpush1.msra.mxu0 0.0
  %284 = vmatprep.subr.mxu0 0.0
  %285 = vmatpush1.msra.mxu0 0.0
  %286 = vmatprep.subr.mxu0 0.0
  %287 = vmatpush1.msra.mxu0 0.0
  %288 = vmatprep.subr.mxu0 0.0
  %289 = vmatpush1.msra.mxu0 0.0
  %290 = vmatprep.subr.mxu0 0.0
  %291 = vmatpush1.msra.mxu0 0.0
  %292 = vmatprep.subr.mxu0 0.0
  %293 = vmatpush1.msra.mxu0 0.0
  %294 = vmatprep.subr.mxu0 0.0
  %295 = vmatpush1.msra.mxu0 0.0
  %296 = vmatprep.subr.mxu0 0.0
  %297 = vmatpush1.msra.mxu0 0.0
  %298 = vmatprep.subr.mxu0 0.0
  %299 = vmatpush1.msra.mxu0 0.0
  %300 = vmatprep.subr.mxu0 0.0
  %301 = vmatpush1.msra.mxu0 0.0
  %302 = vmatprep.subr.mxu0 0.0
  %303 = vmatpush1.msra.mxu0 0.0
  %304 = vmatprep.subr.mxu0 0.0
  %305 = vmatpush1.msra.mxu0 0.0
  %306 = vmatprep.subr.mxu0 0.0
  %307 = vmatpush1.msra.mxu0 0.0
  %308 = vmatprep.subr.mxu0 0.0
  %309 = vmatpush1.msra.mxu0 0.0
  %310 = vmatprep.subr.mxu0 0.0
  %311 = vmatpush1.msra.mxu0 0.0
  %312 = vmatprep.subr.mxu0 0.0
  %313 = vmatpush1.msra.mxu0 0.0
  %314 = vmatprep.mubr.f32.mxu0 0.0
  %315 = vmatmul.mubr.f32.gmra.mrb[0].mxu0 %v213
  %v316 = vpop.f32.mrb[0].mxu0
  %v317 = vadd.f32 0.0, %v316
  %v318 = vpop.f32.mrb[0].mxu0
  %319 = vdwg.mxu0
  %v320 = vmul.f32 %v249, %v238
  %v321 = vmul.f32 %v320, %v317
  %v323 = vlaneseq
  %v324 = vshrl.u32 %v323, 7
  %v325 = vsub.s32 0, %v324
  %v326 = vrot.slane %v232, %v325
  %v328 = vmul.f32 %v247, %v326
  %v329 = vsub.f32 %v321, %v328
  %vm330 = vcmp.ge.f32.partialorder %v329, 0.0
  %v331 = vsel %vm330, 1.0, -1.0
  %v332 = vand.u32 2147483647, %v329
  %v333 = vmul.f32 %v332, %v332
  %v334 = vadd.f32 %v333, 1.0
  %v335 = vrsqrt.pop %v334
  %v336 = vmul.f32 %v334, %v335
  %vm337 = vcmp.eq.f32.partialorder %v334, inf
  %v338 = vsel %vm337, %v334, %v336
  %vm339 = vcmp.eq.f32.partialorder %v334, 0.0
  %v340 = vand.u32 %v334, 2147483648
  %v341 = vsel %vm339, %v340, %v338
  %v342 = vadd.f32 %v332, %v341
  %v343 = vlog2.pop %v342
  %v344 = vmul.f32 %v343, 0.6931472
  %v345 = vmul.f32 %v331, %v344
  %v347 = vlaneseq
  %v348 = vshrl.u32 %v347, 7
  %v349 = vsub.s32 0, %v348
  %v350 = vrot.slane %v233, %v349
  %v352 = vmul.f32 %v350, %v345
  %v353 = vmax.f32 %v352, -30.0
  %v354 = vmin.f32 %v353, 30.0
  %v355 = vmul.f32 %v354, 1.442695
  %v356 = vpow.pop %v355
  %v357 = vrcp.pop %v356
  %v358 = vmul.f32 1.0, %v357
  %v359 = vsub.f32 %v356, %v358
  %v360 = vmul.f32 %v359, 0.5
  %v361 = vmul.f32 %v360, %v360
  %362 = vadd.xlane.f32.xlu0 %v361
  %v363 = vpop.xlane.xlu0 %362
  %v364 = vmax.f32 %v363, 1e-30
  %v365 = vrsqrt.pop %v364
  %v366 = vmul.f32 %v364, %v365
  %v367 = vmul.f32 %v366, %v366
  %v368 = vadd.f32 %v367, 1.0
  %v369 = vrsqrt.pop %v368
  %v370 = vmul.f32 %v368, %v369
  %vm371 = vcmp.eq.f32.partialorder %v368, inf
  %v372 = vsel %vm371, %v368, %v370
  %vm373 = vcmp.eq.f32.partialorder %v368, 0.0
  %v374 = vand.u32 %v368, 2147483648
  %v375 = vsel %vm373, %v374, %v372
  %v376 = vadd.f32 %v366, %v375
  %v377 = vlog2.pop %v376
  %v378 = vmul.f32 %v377, 0.6931472
  %v379 = vmul.f32 %v365, 0.5
  %v380 = vmul.f32 %v378, %v379
  %v381 = vmul.f32 %v380, %v360
  %v382 = vmax.f32 %v381, 0.0
  %v383 = vld [vmem:[%s8] sm:$0xff]
  %v384 = vld [vmem:[%s8 + $0x8] sm:$0xff]
  %v385 = vld [vmem:[%s8 + $0x10] sm:$0xff]
  %v386 = vld [vmem:[%s8 + $0x18] sm:$0xff]
  %v387 = vld [vmem:[%s8 + $0x20] sm:$0xff]
  %v388 = vld [vmem:[%s8 + $0x28] sm:$0xff]
  %v389 = vld [vmem:[%s8 + $0x30] sm:$0xff]
  %v390 = vld [vmem:[%s8 + $0x38] sm:$0xff]
  %v391 = vld [vmem:[%s8 + $0x40] sm:$0xff]
  %v392 = vld [vmem:[%s8 + $0x48] sm:$0xff]
  %v393 = vld [vmem:[%s8 + $0x50] sm:$0xff]
  %v394 = vld [vmem:[%s8 + $0x58] sm:$0xff]
  %v395 = vld [vmem:[%s8 + $0x60] sm:$0xff]
  %v396 = vld [vmem:[%s8 + $0x68] sm:$0xff]
  %v397 = vld [vmem:[%s8 + $0x70] sm:$0xff]
  %v398 = vld [vmem:[%s8 + $0x78] sm:$0xff]
  %v399 = vld [vmem:[%s9] sm:$0x1]
  %v400 = vld [vmem:[%s10] sm:$0x1]
  %v401 = vmul.f32 %v382, %v382
  %402 = vadd.xlane.f32.xlu0 %v401
  %v403 = vpop.xlane.xlu0 %402
  %v404 = vmax.f32 %v403, 1e-30
  %v405 = vrsqrt.pop %v404
  %v406 = vmul.f32 %v404, 2.0
  %v407 = vmul.f32 %v406, %v405
  %v408 = vmin.f32 %v407, 60.0
  %v409 = vmul.f32 %v408, 1.442695
  %v410 = vpow.pop %v409
  %v411 = vrcp.pop %v410
  %v412 = vmul.f32 1.0, %v411
  %v413 = vadd.f32 %v410, %v412
  %v414 = vmul.f32 %v413, 0.5
  %v415 = vsub.f32 %v410, %v412
  %v416 = vmul.f32 %v415, 0.5
  %417 = vmatprep.subr.mxu0 0.0
  %418 = vmatpush1.msra.mxu0 %v383
  %419 = vmatprep.subr.mxu0 0.0
  %420 = vmatpush1.msra.mxu0 %v384
  %421 = vmatprep.subr.mxu0 0.0
  %422 = vmatpush1.msra.mxu0 %v385
  %423 = vmatprep.subr.mxu0 0.0
  %424 = vmatpush1.msra.mxu0 %v386
  %425 = vmatprep.subr.mxu0 0.0
  %426 = vmatpush1.msra.mxu0 %v387
  %427 = vmatprep.subr.mxu0 0.0
  %428 = vmatpush1.msra.mxu0 %v388
  %429 = vmatprep.subr.mxu0 0.0
  %430 = vmatpush1.msra.mxu0 %v389
  %431 = vmatprep.subr.mxu0 0.0
  %432 = vmatpush1.msra.mxu0 %v390
  %433 = vmatprep.subr.mxu0 0.0
  %434 = vmatpush1.msra.mxu0 %v391
  %435 = vmatprep.subr.mxu0 0.0
  %436 = vmatpush1.msra.mxu0 %v392
  %437 = vmatprep.subr.mxu0 0.0
  %438 = vmatpush1.msra.mxu0 %v393
  %439 = vmatprep.subr.mxu0 0.0
  %440 = vmatpush1.msra.mxu0 %v394
  %441 = vmatprep.subr.mxu0 0.0
  %442 = vmatpush1.msra.mxu0 %v395
  %443 = vmatprep.subr.mxu0 0.0
  %444 = vmatpush1.msra.mxu0 %v396
  %445 = vmatprep.subr.mxu0 0.0
  %446 = vmatpush1.msra.mxu0 %v397
  %447 = vmatprep.subr.mxu0 0.0
  %448 = vmatpush1.msra.mxu0 %v398
  %449 = vmatprep.subr.mxu0 0.0
  %450 = vmatpush1.msra.mxu0 0.0
  %451 = vmatprep.subr.mxu0 0.0
  %452 = vmatpush1.msra.mxu0 0.0
  %453 = vmatprep.subr.mxu0 0.0
  %454 = vmatpush1.msra.mxu0 0.0
  %455 = vmatprep.subr.mxu0 0.0
  %456 = vmatpush1.msra.mxu0 0.0
  %457 = vmatprep.subr.mxu0 0.0
  %458 = vmatpush1.msra.mxu0 0.0
  %459 = vmatprep.subr.mxu0 0.0
  %460 = vmatpush1.msra.mxu0 0.0
  %461 = vmatprep.subr.mxu0 0.0
  %462 = vmatpush1.msra.mxu0 0.0
  %463 = vmatprep.subr.mxu0 0.0
  %464 = vmatpush1.msra.mxu0 0.0
  %465 = vmatprep.subr.mxu0 0.0
  %466 = vmatpush1.msra.mxu0 0.0
  %467 = vmatprep.subr.mxu0 0.0
  %468 = vmatpush1.msra.mxu0 0.0
  %469 = vmatprep.subr.mxu0 0.0
  %470 = vmatpush1.msra.mxu0 0.0
  %471 = vmatprep.subr.mxu0 0.0
  %472 = vmatpush1.msra.mxu0 0.0
  %473 = vmatprep.subr.mxu0 0.0
  %474 = vmatpush1.msra.mxu0 0.0
  %475 = vmatprep.subr.mxu0 0.0
  %476 = vmatpush1.msra.mxu0 0.0
  %477 = vmatprep.subr.mxu0 0.0
  %478 = vmatpush1.msra.mxu0 0.0
  %479 = vmatprep.subr.mxu0 0.0
  %480 = vmatpush1.msra.mxu0 0.0
  %481 = vmatprep.mubr.f32.mxu0 0.0
  %482 = vmatmul.mubr.f32.gmra.mrb[0].mxu0 %v382
  %v483 = vpop.f32.mrb[0].mxu0
  %v484 = vadd.f32 0.0, %v483
  %v485 = vpop.f32.mrb[0].mxu0
  %486 = vdwg.mxu0
  %v487 = vmul.f32 %v416, %v405
  %v488 = vmul.f32 %v487, %v484
  %v490 = vlaneseq
  %v491 = vshrl.u32 %v490, 7
  %v492 = vsub.s32 0, %v491
  %v493 = vrot.slane %v399, %v492
  %v495 = vmul.f32 %v414, %v493
  %v496 = vsub.f32 %v488, %v495
  %vm497 = vcmp.ge.f32.partialorder %v496, 0.0
  %v498 = vsel %vm497, 1.0, -1.0
  %v499 = vand.u32 2147483647, %v496
  %v500 = vmul.f32 %v499, %v499
  %v501 = vadd.f32 %v500, 1.0
  %v502 = vrsqrt.pop %v501
  %v503 = vmul.f32 %v501, %v502
  %vm504 = vcmp.eq.f32.partialorder %v501, inf
  %v505 = vsel %vm504, %v501, %v503
  %vm506 = vcmp.eq.f32.partialorder %v501, 0.0
  %v507 = vand.u32 %v501, 2147483648
  %v508 = vsel %vm506, %v507, %v505
  %v509 = vadd.f32 %v499, %v508
  %v510 = vlog2.pop %v509
  %v511 = vmul.f32 %v510, 0.6931472
  %v512 = vmul.f32 %v498, %v511
  %v514 = vlaneseq
  %v515 = vshrl.u32 %v514, 7
  %v516 = vsub.s32 0, %v515
  %v517 = vrot.slane %v400, %v516
  %v519 = vmul.f32 %v517, %v512
  %v520 = vmax.f32 %v519, -30.0
  %v521 = vmin.f32 %v520, 30.0
  %v522 = vmul.f32 %v521, 1.442695
  %v523 = vpow.pop %v522
  %v524 = vrcp.pop %v523
  %v525 = vmul.f32 1.0, %v524
  %v526 = vsub.f32 %v523, %v525
  %v527 = vmul.f32 %v526, 0.5
  %v528 = vmul.f32 %v527, %v527
  %529 = vadd.xlane.f32.xlu0 %v528
  %v530 = vpop.xlane.xlu0 %529
  %v531 = vadd.f32 %v530, 1.0
  %v532 = vrsqrt.pop %v531
  %v533 = vmul.f32 %v531, %v532
  %vm534 = vcmp.eq.f32.partialorder %v531, inf
  %v535 = vsel %vm534, %v531, %v533
  %vm536 = vcmp.eq.f32.partialorder %v531, 0.0
  %v537 = vand.u32 %v531, 2147483648
  %v538 = vsel %vm536, %v537, %v535
  %v539 = vadd.f32 %v538, 1.0
  %v540 = vrcp.pop %v539
  %v541 = vmul.f32 %v527, %v540
  %542 = vst [vmem:[%s11] sm:$0xff] %v541
  // Predicated region
  $region46: #{_forward.1} parent=0 // pred_check
    _
  $region47: #{_forward.1} parent=0 // pred_check_branch
    %544 = sbr.rel (0) target = $region49
  $region48: #{_forward.1} parent=0 // pred_region
    _
  $region49: #{_forward.1} parent=0 // pred_fallthru
    _
  // Predicated region
  $region50: #{_forward.1} parent=0 // pred_check
    _
  $region51: #{_forward.1} parent=0 // pred_check_branch
    %546 = sbr.rel (0) target = $region53
  $region52: #{_forward.1} parent=0 // pred_region
    _
  $region53: #{_forward.1} parent=0 // pred_fallthru
    _

</llo_original>
